<compile_context>
chip_gen: v7x
topology: tpu7x:2x2x1
jax: 0.10.0
libtpu: 0.0.40
codegen_flags: <defaults>
</compile_context>

<pallas_src>
import jax
import jax.numpy as jnp
from jax.experimental import pallas as pl
from jax.experimental.pallas import tpu as pltpu


def mean_pool_head_kernel(h_ref, m_ref, w_ref, b_ref, out_ref, acc_ref, cnt_ref):
    # h_ref:   [b_tile, s_tile, H]   hidden-state tile (storage dtype, e.g. bf16)
    # m_ref:   [b_tile, 1, s_tile]   attention-mask tile (storage dtype, lane-dense on S)
    # w_ref:   [1, H] f32            linear weight (torch nn.Linear layout)
    # b_ref:   [1]    f32            linear bias (SMEM scalar)
    # out_ref: [1, 1, b_tile] f32    logits for this batch tile (lane-dense)
    # acc_ref: [b_tile, 1, H] f32    running masked sum over S
    # cnt_ref: [b_tile, 1]    f32    running mask count over S
    si = pl.program_id(1)

    @pl.when(si == 0)
    def _init():
        acc_ref[...] = jnp.zeros_like(acc_ref)
        cnt_ref[...] = jnp.zeros_like(cnt_ref)

    h = h_ref[...]                              # keep storage dtype -- no f32 upcast
    m = m_ref[...].astype(h.dtype)              # in-kernel cast; 0/1 exact in bf16

    # Masked sum over this S chunk on the MXU (contract S), f32 accumulate:
    #   acc[b, 0, :] += sum_s m[b, 0, s] * h[b, s, :]
    acc_ref[...] += jnp.einsum('bqs,bsh->bqh', m, h,
                               preferred_element_type=jnp.float32)
    cnt_ref[...] += jnp.sum(m.astype(jnp.float32), axis=2)      # [b_tile, 1]

    @pl.when(si == pl.num_programs(1) - 1)
    def _finalize():
        denom = jnp.maximum(cnt_ref[...], 1e-9)                  # clamp(sum_mask, 1e-9)
        mean_emb = (acc_ref[...][:, 0, :]
                    * pl.reciprocal(denom, approx=False))        # [b_tile, H] f32
        # head: contract H of [1,H] with H of [b_tile,H] -> lane-dense [1, b_tile]
        logits = jax.lax.dot_general(
            w_ref[...], mean_emb,
            dimension_numbers=(((1,), (1,)), ((), ())),
            preferred_element_type=jnp.float32)
        out_ref[...] = (logits + b_ref[0])[None]                 # [1, 1, b_tile]


def _pick_tiles(B, S, H, h_itemsize, b_tile, s_tile):
    """Generation-aware tile / VMEM-limit selection."""
    try:
        vmem_cap = getattr(pltpu.get_tpu_info(), "vmem_capacity_bytes",
                           64 * 1024 * 1024)
    except Exception:
        vmem_cap = 64 * 1024 * 1024                 # assume the smaller (v7x) part
    if vmem_cap >= 96 * 1024 * 1024:                # 128-MiB VMEM parts (v5e / v6e)
        vmem_limit = 96 * 1024 * 1024
        h_budget = 48 * 1024 * 1024                 # for the 2x-buffered h block
    else:                                           # 64-MiB VMEM parts (v7x)
        vmem_limit = 48 * 1024 * 1024
        h_budget = 20 * 1024 * 1024

    if b_tile is None:
        if B <= 8:
            b_tile = B
        else:
            # multiple of 8, keep nb >= 2 so the parallel B axis can megacore-shard
            b_tile = max(8, min(128, ((B // 2) // 8) * 8))
    # shrink b_tile if even the minimal s_tile would blow the h budget
    min_s = min(S, 128)
    while b_tile > 8 and 2 * b_tile * min_s * H * h_itemsize > h_budget:
        b_tile -= 8

    if s_tile is None:
        max_s = max(128, h_budget // (2 * b_tile * H * h_itemsize))
        if S <= max_s:
            s_tile = S                               # whole sequence per step
        elif S % 128 == 0:
            cand = (max_s // 128) * 128              # largest 128-multiple divisor of S
            while cand > 128 and S % cand != 0:
                cand -= 128
            s_tile = max(cand, 128)
        else:
            s_tile = (max_s // 128) * 128            # rare: will trigger the S-pad fallback
    return b_tile, s_tile, vmem_limit


def mean_pooling_head(last_hidden_state, attention_mask, weight, bias,
                      *, b_tile=None, s_tile=None):
    """last_hidden_state: [B,S,H] (bf16 preferred), attention_mask: [B,S] (any int/bool/float),
    weight: [1,H] (torch nn.Linear layout), bias: [1].  Returns preds [B] f32."""
    B, S, H = last_hidden_state.shape
    b_tile, s_tile, vmem_limit = _pick_tiles(
        B, S, H, last_hidden_state.dtype.itemsize, b_tile, s_tile)

    nb = pl.cdiv(B, b_tile)
    ns = pl.cdiv(S, s_tile)

    h = last_hidden_state                  # storage dtype (bf16) straight onto the DMA path
    m = attention_mask                     # stored dtype; cast happens in-kernel

    S_pad = ns * s_tile
    if S_pad != S:
        # TODO(synk): rare fallback (S has no 128-multiple divisor that fits VMEM); this
        # materializes one extra HBM copy of h.  Padded tokens carry mask 0 -> contribute nothing.
        h = jnp.pad(h, ((0, 0), (0, S_pad - S), (0, 0)))
        m = jnp.pad(m, ((0, 0), (0, S_pad - S)))

    m = m.reshape(B, 1, S_pad)                          # free view; lane-dense on S
    w = weight.astype(jnp.float32).reshape(1, H)        # torch Linear weight is [1, H]
    b = bias.astype(jnp.float32).reshape(1)             # scalar -> SMEM

    out = pl.pallas_call(
        mean_pool_head_kernel,
        out_shape=jax.ShapeDtypeStruct((nb, 1, b_tile), jnp.float32),
        grid_spec=pltpu.PrefetchScalarGridSpec(
            num_scalar_prefetch=0,
            grid=(nb, ns),                               # S (reduction) last
            in_specs=[
                pl.BlockSpec((b_tile, s_tile, H), lambda bi, si: (bi, si, 0)),
                pl.BlockSpec((b_tile, 1, s_tile), lambda bi, si: (bi, 0, si)),
                pl.BlockSpec((1, H), lambda bi, si: (0, 0)),
                pl.BlockSpec(memory_space=pltpu.MemorySpace.SMEM),
            ],
            out_specs=pl.BlockSpec((1, 1, b_tile), lambda bi, si: (bi, 0, 0)),
            scratch_shapes=[
                pltpu.VMEM((b_tile, 1, H), jnp.float32),   # masked-sum accumulator
                pltpu.VMEM((b_tile, 1), jnp.float32),      # token count
            ],
        ),
        compiler_params=pltpu.CompilerParams(
            dimension_semantics=("parallel", "arbitrary"),
            vmem_limit_bytes=vmem_limit,
        ),
    )(h, m, w, b)

    # Ragged B tail (if any) produced garbage rows in the last block; drop them here.
    return out.reshape(nb * b_tile)[:B]


def reference_head(last_hidden_state, attention_mask, weight, bias):
    hf = last_hidden_state.astype(jnp.float32)
    m = attention_mask.astype(jnp.float32)[..., None]
    sum_emb = jnp.sum(hf * m, axis=1)
    sum_mask = jnp.maximum(jnp.sum(m, axis=1), 1e-9)
    mean_emb = sum_emb / sum_mask
    return (mean_emb @ weight.astype(jnp.float32).T
            + bias.astype(jnp.float32)).reshape(-1)


if __name__ == "__main__":
    BATCH, SEQ, HIDDEN, VOCAB = 16, 256, 128, 512   # small stand-ins (real model: H=1024)

    key = jax.random.PRNGKey(0)
    k_emb, k_ids, k_len, k_w, k_b = jax.random.split(key, 5)

    # TODO(synk): AutoModel transformer backbone stood in by an embedding lookup.
    embedding_table = (jax.random.normal(k_emb, (VOCAB, HIDDEN), jnp.float32)
                       * 0.02).astype(jnp.bfloat16)
    input_ids = jax.random.randint(k_ids, (BATCH, SEQ), 0, VOCAB, jnp.int32)
    last_hidden_state = embedding_table[input_ids]            # [B, S, H] bf16

    lens = jax.random.randint(k_len, (BATCH,), 1, SEQ + 1, jnp.int32)
    attention_mask = (jnp.arange(SEQ)[None, :] < lens[:, None]).astype(jnp.int32)

    linear_weight = jax.random.normal(k_w, (1, HIDDEN), jnp.float32) * 0.1
    linear_bias = jax.random.normal(k_b, (1,), jnp.float32) * 0.1

    preds = mean_pooling_head(last_hidden_state, attention_mask,
                              linear_weight, linear_bias,
                              b_tile=8, s_tile=128)   # grid = (2 B-tiles, 2 S-steps)
    preds = jax.block_until_ready(preds)

    ref = reference_head(last_hidden_state, attention_mask,
                         linear_weight, linear_bias)
    assert preds.shape == (BATCH,)
    assert jnp.allclose(preds, ref, atol=5e-5, rtol=2e-4), (preds, ref)
    print("KERNEL_OK")
</pallas_src>

<mosaic_0001>
module attributes {stable_mosaic.version = 11 : i64} {
  func.func @mean_pool_head_kernel(%arg0: i32, %arg1: i32, %arg2: memref<8x128x128xbf16, #tpu.memory_space<vmem>>, %arg3: memref<8x1x128xi32, #tpu.memory_space<vmem>>, %arg4: memref<1x128xf32, #tpu.memory_space<vmem>>, %arg5: memref<1xf32, #tpu.memory_space<smem>>, %arg6: memref<1x1x8xf32, #tpu.memory_space<vmem>>, %arg7: memref<8x1x128xf32, #tpu.memory_space<vmem>>, %arg8: memref<8x1xf32, #tpu.memory_space<vmem>>) attributes {dimension_semantics = [#tpu.dimension_semantics<parallel>, #tpu.dimension_semantics<arbitrary>], iteration_bounds = array<i64: 2, 2>, scalar_prefetch = 0 : i64, scratch_operands = 2 : i64, tpu.core_type = #tpu.core_type<tc>, window_params = [{transform_indices = @transform_0, window_bounds = array<i64: 8, 128, 128>}, {transform_indices = @transform_1, window_bounds = array<i64: 8, 1, 128>}, {pipeline_mode = #tpu.pipeline_mode<synchronous>, transform_indices = @transform_2, window_bounds = array<i64: 1, 128>}, {transform_indices = @transform_3, window_bounds = array<i64: 1>}, {transform_indices = @transform_4, window_bounds = array<i64: 1, 1, 8>}]} {
    %c0_i32 = arith.constant 0 : i32
    %0 = arith.cmpi eq, %arg1, %c0_i32 : i32
    %1 = arith.extui %0 : i1 to i32
    %c0_i32_0 = arith.constant 0 : i32
    %2 = arith.cmpi ne, %1, %c0_i32_0 : i32
    scf.if %2 {
      %cst_18 = arith.constant 0.000000e+00 : f32
      %18 = vector.broadcast %cst_18 : f32 to vector<8x1x128xf32>
      %c0_19 = arith.constant 0 : index
      %c0_20 = arith.constant 0 : index
      %c0_21 = arith.constant 0 : index
      %19 = vector.load %arg7[%c0_19, %c0_20, %c0_21] : memref<8x1x128xf32, #tpu.memory_space<vmem>>, vector<8x1x128xf32>
      tpu.vector_store %arg7[%c0_19, %c0_20, %c0_21], %18 {strides = array<i32>} : memref<8x1x128xf32, #tpu.memory_space<vmem>>, vector<8x1x128xf32>,
      %cst_22 = arith.constant 0.000000e+00 : f32
      %20 = vector.broadcast %cst_22 : f32 to vector<8x1xf32>
      %c0_23 = arith.constant 0 : index
      %c0_24 = arith.constant 0 : index
      %21 = vector.load %arg8[%c0_23, %c0_24] : memref<8x1xf32, #tpu.memory_space<vmem>>, vector<8x1xf32>
      tpu.vector_store %arg8[%c0_23, %c0_24], %20 {strides = array<i32>} : memref<8x1xf32, #tpu.memory_space<vmem>>, vector<8x1xf32>,
    } else {
    }
    %c0 = arith.constant 0 : index
    %c0_1 = arith.constant 0 : index
    %c0_2 = arith.constant 0 : index
    %3 = vector.load %arg2[%c0, %c0_1, %c0_2] : memref<8x128x128xbf16, #tpu.memory_space<vmem>>, vector<8x128x128xbf16>
    %c0_3 = arith.constant 0 : index
    %c0_4 = arith.constant 0 : index
    %c0_5 = arith.constant 0 : index
    %4 = vector.load %arg3[%c0_3, %c0_4, %c0_5] : memref<8x1x128xi32, #tpu.memory_space<vmem>>, vector<8x1x128xi32>
    %5 = arith.sitofp %4 : vector<8x1x128xi32> to vector<8x1x128xbf16>
    %c0_6 = arith.constant 0 : index
    %c0_7 = arith.constant 0 : index
    %c0_8 = arith.constant 0 : index
    %6 = vector.load %arg7[%c0_6, %c0_7, %c0_8] : memref<8x1x128xf32, #tpu.memory_space<vmem>>, vector<8x1x128xf32>
    "tpu.trace_start"() <{level = 10 : i32, message = "bqs,bsh->bqh"}> : () -> ()
    %cst = arith.constant dense<0.000000e+00> : vector<8x1x128xf32>
    %7 = tpu.matmul %5, %3, %cst {dimension_numbers = #tpu.dot_dimension_numbers<[2], [1], [1], [2], [0, 0, 0, 1, 1, 2], [0], [0]>} : vector<8x1x128xbf16>, vector<8x128x128xbf16>, vector<8x1x128xf32> -> vector<8x1x128xf32>
    "tpu.trace_stop"() : () -> ()
    %8 = arith.addf %6, %7 : vector<8x1x128xf32>
    %c0_9 = arith.constant 0 : index
    %c0_10 = arith.constant 0 : index
    %c0_11 = arith.constant 0 : index
    %9 = vector.load %arg7[%c0_9, %c0_10, %c0_11] : memref<8x1x128xf32, #tpu.memory_space<vmem>>, vector<8x1x128xf32>
    tpu.vector_store %arg7[%c0_9, %c0_10, %c0_11], %8 {strides = array<i32>} : memref<8x1x128xf32, #tpu.memory_space<vmem>>, vector<8x1x128xf32>,
    %c0_12 = arith.constant 0 : index
    %c0_13 = arith.constant 0 : index
    %10 = vector.load %arg8[%c0_12, %c0_13] : memref<8x1xf32, #tpu.memory_space<vmem>>, vector<8x1xf32>
    %11 = arith.extf %5 : vector<8x1x128xbf16> to vector<8x1x128xf32>
    %cst_14 = arith.constant dense<0.000000e+00> : vector<8x1xf32>
    %12 = vector.multi_reduction <add>, %11, %cst_14 [2] : vector<8x1x128xf32> to vector<8x1xf32>
    %13 = arith.addf %10, %12 : vector<8x1xf32>
    %c0_15 = arith.constant 0 : index
    %c0_16 = arith.constant 0 : index
    %14 = vector.load %arg8[%c0_15, %c0_16] : memref<8x1xf32, #tpu.memory_space<vmem>>, vector<8x1xf32>
    tpu.vector_store %arg8[%c0_15, %c0_16], %13 {strides = array<i32>} : memref<8x1xf32, #tpu.memory_space<vmem>>, vector<8x1xf32>,
    %c1_i32 = arith.constant 1 : i32
    %15 = arith.cmpi eq, %arg1, %c1_i32 : i32
    %16 = arith.extui %15 : i1 to i32
    %c0_i32_17 = arith.constant 0 : i32
    %17 = arith.cmpi ne, %16, %c0_i32_17 : i32
    scf.if %17 {
      %c0_18 = arith.constant 0 : index
      %c0_19 = arith.constant 0 : index
      %18 = vector.load %arg8[%c0_18, %c0_19] : memref<8x1xf32, #tpu.memory_space<vmem>>, vector<8x1xf32>
      %cst_20 = arith.constant 9.99999971E-10 : f32
      %19 = vector.broadcast %cst_20 : f32 to vector<8x1xf32>
      %20 = arith.maximumf %18, %19 : vector<8x1xf32>
      %c0_21 = arith.constant 0 : index
      %c0_22 = arith.constant 0 : index
      %c0_23 = arith.constant 0 : index
      %21 = vector.load %arg7[%c0_21, %c0_22, %c0_23] : memref<8x1x128xf32, #tpu.memory_space<vmem>>, vector<8x1x128xf32>
      %22 = vector.shape_cast %21 : vector<8x1x128xf32> to vector<8x128xf32>
      %23 = tpu.reciprocal %20 : vector<8x1xf32> -> vector<8x1xf32>
      %24 = vector.broadcast %23 : vector<8x1xf32> to vector<8x128xf32>
      %25 = arith.mulf %22, %24 : vector<8x128xf32>
      %c0_24 = arith.constant 0 : index
      %c0_25 = arith.constant 0 : index
      %26 = vector.load %arg4[%c0_24, %c0_25] : memref<1x128xf32, #tpu.memory_space<vmem>>, vector<1x128xf32>
      %cst_26 = arith.constant dense<0.000000e+00> : vector<1x8xf32>
      %27 = tpu.matmul %26, %25, %cst_26 {dimension_numbers = #tpu.dot_dimension_numbers<[1], [1], [0], [0], [0, 0, 1, 0], [], []>} : vector<1x128xf32>, vector<8x128xf32>, vector<1x8xf32> -> vector<1x8xf32>
      %c0_27 = arith.constant 0 : index
      %28 = memref.load %arg5[%c0_27] : memref<1xf32, #tpu.memory_space<smem>>
      %29 = vector.broadcast %28 : f32 to vector<1x8xf32>
      %30 = arith.addf %27, %29 : vector<1x8xf32>
      %31 = vector.shape_cast %30 : vector<1x8xf32> to vector<1x1x8xf32>
      %c0_28 = arith.constant 0 : index
      %c0_29 = arith.constant 0 : index
      %c0_30 = arith.constant 0 : index
      %32 = vector.load %arg6[%c0_28, %c0_29, %c0_30] : memref<1x1x8xf32, #tpu.memory_space<vmem>>, vector<1x1x8xf32>
      tpu.vector_store %arg6[%c0_28, %c0_29, %c0_30], %31 {strides = array<i32>} : memref<1x1x8xf32, #tpu.memory_space<vmem>>, vector<1x1x8xf32>,
    } else {
    }
    return
  }
  func.func @transform_0(%arg0: i32, %arg1: i32) -> (i32, i32, i32) {
    %c0_i32 = arith.constant 0 : i32
    %c0_i32_0 = arith.constant 0 : i32
    return %arg0, %arg1, %c0_i32 : i32, i32, i32
  }
  func.func @transform_1(%arg0: i32, %arg1: i32) -> (i32, i32, i32) {
    %c0_i32 = arith.constant 0 : i32
    %c0_i32_0 = arith.constant 0 : i32
    return %arg0, %c0_i32, %arg1 : i32, i32, i32
  }
  func.func @transform_2(%arg0: i32, %arg1: i32) -> (i32, i32) {
    %c0_i32 = arith.constant 0 : i32
    %c0_i32_0 = arith.constant 0 : i32
    %c0_i32_1 = arith.constant 0 : i32
    return %c0_i32, %c0_i32_0 : i32, i32
  }
  func.func @transform_3(%arg0: i32, %arg1: i32) -> i32 {
    %c0_i32 = arith.constant 0 : i32
    %c0_i32_0 = arith.constant 0 : i32
    return %c0_i32 : i32
  }
  func.func @transform_4(%arg0: i32, %arg1: i32) -> (i32, i32, i32) {
    %c0_i32 = arith.constant 0 : i32
    %c0_i32_0 = arith.constant 0 : i32
    %c0_i32_1 = arith.constant 0 : i32
    return %arg0, %c0_i32, %c0_i32_0 : i32, i32, i32
  }
}

</mosaic_0001>

<llo_original>
// kernel: tpu_custom_call.1
$region0: #{tpu_custom_call.1}
  #allocation0 [shape = 'u32[]', space=smem, size = 0x4, offset = 0x4, fixed_abs, tag = 'smem constant byte address 0x4 - core index']
  #allocation1 [shape = 'u32[144,128]{1,0:T(1,128)}', space=vmem, size = 0x12000, scoped, tag = 'internal scratch']
  #allocation2 [shape = 'f32[8,1,128]{2,1,0:T(1,128)}', space=vmem, size = 0x1000, scoped, tag = 'scratch operand']
  #allocation3 [shape = 'f32[8,1]{1,0:T(8,128)}', space=vmem, size = 0x1000, scoped, tag = 'scratch operand']
  #allocation4 [shape = 'f32[1]{0:T(128)S(6)}', space=smem, size = 0x200, scoped, tag = 'scoped memory for tpu_custom_call.1']
  #allocation11 [shape = 's32[]', space=sflag, size = 0x4, offset = 0, fixed_abs, tag = 'sflag constant byte address 0x0 - dummy sync flag']
  %s0 = inlined_call_operand.hbm [shape: bf16[16,256,128], index: 0, kind: input, shape index: {}]
  %s1 = inlined_call_operand.hbm [shape: s32[16,1,256], index: 1, kind: input, shape index: {}]
  %s2 = inlined_call_operand.vmem [shape: f32[1,128], index: 2, kind: input, shape index: {}]
  %s3 = inlined_call_operand.<no memory space> [shape: f32[1], index: 3, kind: input, shape index: {}]
  %s4 = inlined_call_operand.hbm [shape: f32[2,1,8], index: 4, kind: output, shape index: {}]
  %s5 = sld [smem:[#allocation0]]
  $region65: #{tpu_custom_call.1} parent=0
    _
  %s7 = ssub.s32 1, %s5
  %s8 = scalar_select 0, %s7, %s5
  %9 = sst [smem:[#allocation4]] %s3
  $region1: #{tpu_custom_call.1} parent=0
    #allocation5 [shape = 'u8[524288]{0}', space=vmem, size = 0x80000, scoped, tag = 'input window, operand 0']
    #allocation6 [shape = 's32[2]{0}', space=sflag, size = 0x8, scoped, tag = 'scoped memory for tpu_custom_call.1']
    #allocation7 [shape = 's32[2]{0}', space=sflag, size = 0x8, scoped, tag = 'scoped memory for tpu_custom_call.1']
    #allocation8 [shape = 'u8[8192]{0}', space=vmem, size = 0x2000, scoped, tag = 'input window, operand 1']
    #allocation9 [shape = 's32[2]{0}', space=sflag, size = 0x8, scoped, tag = 'scoped memory for tpu_custom_call.1']
    #allocation10 [shape = 'u8[1024]{0}', space=vmem, size = 0x400, scoped, tag = 'output window, operand 0']
    %10 = vsyncpa [#allocation6], 0
    %s11 = scalar_lea.sflag [#allocation6], 1
    %12 = vsyncpa %s11, 0
    %13 = vsyncpa [#allocation9], 0
    %s14 = scalar_lea.sflag [#allocation9], 1
    %15 = vsyncpa %s14, 0
    %16 = vsyncpa [#allocation7], 0
    %s17 = scalar_lea.sflag [#allocation7], 1
    %18 = vsyncpa %s17, 0
    loop: start=0, step=1, limit=6
    $region2: #{tpu_custom_call.1} parent=1 // loop_pre_header
      _
    $region3: #{tpu_custom_call.1} parent=1 // loop_header
      %s20 = sphi 0, %s24
      %p21 = scmp.ge.s32.totalorder %s20, 6
      %s27 = sphi 0, %s39
      %s28 = sphi 0, %s35
      %s29 = sphi 0, %s27
      %s30 = sphi 0, %s28
      %s31 = sphi 0, %s29
      %s32 = sphi 0, %s30
      %s44 = sphi 0, %s46
      %s47 = sphi 0, %s44
      %s48 = sphi 0, %s47
      %s64 = sphi 0, %s48
      %s72 = sphi 0, %s74
      %s75 = sphi 0, %s72
      %s76 = sphi 0, %s75
      %s92 = sphi 0, %s76
      %s96 = sphi 0, %s96
      %s98 = sphi 0, %s96
      %s99 = sphi 0, %s98
      %s113 = sphi 0, %s99
      %s117 = sphi 0, %s117
      %s119 = sphi 0, %s117
      %s120 = sphi 0, %s119
      %s134 = sphi 0, %s120
      %s140 = sphi 0, %s142
      %s143 = sphi 0, %s140
      %s144 = sphi 0, %s143
      %s160 = sphi 0, %s144
    $region4: #{tpu_custom_call.1} parent=1 // loop_header_branch
      %23 = sbr.rel (%p21) target = $region8
    $region5: #{tpu_custom_call.1} parent=1 // loop_body
      %s25 = ssub.s32 %s20, 1
      %s26 = ssub.s32 %s20, 2
      %s33 = sadd.s32 1, %s28
      %p34 = scmp.ge.s32.totalorder %s33, 2
      %s35 = scalar_select %p34, 0, %s33
      %s36 = sadd.s32 1, %s27
      %s37 = scalar_select %p34, %s36, %s27
      %p38 = scmp.ge.s32.totalorder %s37, 2
      %s39 = scalar_select %p38, 0, %s37
      %s40 = ssub.s32 %s27, %s39
      %s41 = ssub.s32 %s28, %s35
      %s42 = sor.u32 %s40, %s41
      %p43 = scmp.eq.s32.totalorder %s42, 0
      %s45 = sadd.s32 %s44, 1
      %s46 = scalar_select %p43, %s44, %s45
      %p49 = pneg %p43
      %p50 = scmp.eq.s32.totalorder %s20, 3
      %p51 = por %p49, %p50
      %p52 = scmp.ne.s32.totalorder %s44, %s47
      %p53 = scmp.eq.s32.totalorder %s20, 0
      %p54 = por %p52, %p53
      %p55 = scmp.ne.s32.totalorder %s44, %s47
      %p56 = scmp.eq.s32.totalorder %s25, 3
      %p57 = por %p55, %p56
      %p58 = scmp.ne.s32.totalorder %s47, %s48
      %p59 = scmp.eq.s32.totalorder %s25, 0
      %p60 = por %p58, %p59
      %p61 = scmp.ne.s32.totalorder %s47, %s48
      %p62 = scmp.eq.s32.totalorder %s26, 3
      %p63 = por %p61, %p62
      %p65 = scmp.ne.s32.totalorder %s48, %s64
      %p66 = scmp.eq.s32.totalorder %s26, 0
      %p67 = por %p65, %p66
      %s68 = ssub.s32 %s27, %s39
      %s69 = ssub.s32 %s28, %s35
      %s70 = sor.u32 %s68, %s69
      %p71 = scmp.eq.s32.totalorder %s70, 0
      %s73 = sadd.s32 %s72, 1
      %s74 = scalar_select %p71, %s72, %s73
      %p77 = pneg %p71
      %p78 = scmp.eq.s32.totalorder %s20, 3
      %p79 = por %p77, %p78
      %p80 = scmp.ne.s32.totalorder %s72, %s75
      %p81 = scmp.eq.s32.totalorder %s20, 0
      %p82 = por %p80, %p81
      %p83 = scmp.ne.s32.totalorder %s72, %s75
      %p84 = scmp.eq.s32.totalorder %s25, 3
      %p85 = por %p83, %p84
      %p86 = scmp.ne.s32.totalorder %s75, %s76
      %p87 = scmp.eq.s32.totalorder %s25, 0
      %p88 = por %p86, %p87
      %p89 = scmp.ne.s32.totalorder %s75, %s76
      %p90 = scmp.eq.s32.totalorder %s26, 3
      %p91 = por %p89, %p90
      %p93 = scmp.ne.s32.totalorder %s76, %s92
      %p94 = scmp.eq.s32.totalorder %s26, 0
      %p95 = por %p93, %p94
      %s97 = sadd.s32 %s96, 1
      %p100 = scmp.eq.s32.totalorder %s20, 3
      %p101 = scmp.ne.s32.totalorder %s96, %s98
      %p102 = scmp.eq.s32.totalorder %s20, 0
      %p103 = por %p101, %p102
      %p104 = scmp.ne.s32.totalorder %s96, %s98
      %p105 = scmp.eq.s32.totalorder %s25, 3
      %p106 = por %p104, %p105
      %p107 = scmp.ne.s32.totalorder %s98, %s99
      %p108 = scmp.eq.s32.totalorder %s25, 0
      %p109 = por %p107, %p108
      %p110 = scmp.ne.s32.totalorder %s98, %s99
      %p111 = scmp.eq.s32.totalorder %s26, 3
      %p112 = por %p110, %p111
      %p114 = scmp.ne.s32.totalorder %s99, %s113
      %p115 = scmp.eq.s32.totalorder %s26, 0
      %p116 = por %p114, %p115
      %s118 = sadd.s32 %s117, 1
      %p121 = scmp.eq.s32.totalorder %s20, 3
      %p122 = scmp.ne.s32.totalorder %s117, %s119
      %p123 = scmp.eq.s32.totalorder %s20, 0
      %p124 = por %p122, %p123
      %p125 = scmp.ne.s32.totalorder %s117, %s119
      %p126 = scmp.eq.s32.totalorder %s25, 3
      %p127 = por %p125, %p126
      %p128 = scmp.ne.s32.totalorder %s119, %s120
      %p129 = scmp.eq.s32.totalorder %s25, 0
      %p130 = por %p128, %p129
      %p131 = scmp.ne.s32.totalorder %s119, %s120
      %p132 = scmp.eq.s32.totalorder %s26, 3
      %p133 = por %p131, %p132
      %p135 = scmp.ne.s32.totalorder %s120, %s134
      %p136 = scmp.eq.s32.totalorder %s26, 0
      %p137 = por %p135, %p136
      %s138 = ssub.s32 %s27, %s39
      %p139 = scmp.eq.s32.totalorder %s138, 0
      %s141 = sadd.s32 %s140, 1
      %s142 = scalar_select %p139, %s140, %s141
      %p145 = pneg %p139
      %p146 = scmp.eq.s32.totalorder %s20, 3
      %p147 = por %p145, %p146
      %p148 = scmp.ne.s32.totalorder %s140, %s143
      %p149 = scmp.eq.s32.totalorder %s20, 0
      %p150 = por %p148, %p149
      %p151 = scmp.ne.s32.totalorder %s140, %s143
      %p152 = scmp.eq.s32.totalorder %s25, 3
      %p153 = por %p151, %p152
      %p154 = scmp.ne.s32.totalorder %s143, %s144
      %p155 = scmp.eq.s32.totalorder %s25, 0
      %p156 = por %p154, %p155
      %p157 = scmp.ne.s32.totalorder %s143, %s144
      %p158 = scmp.eq.s32.totalorder %s26, 3
      %p159 = por %p157, %p158
      %p161 = scmp.ne.s32.totalorder %s144, %s160
      %p162 = scmp.eq.s32.totalorder %s26, 0
      %p163 = por %p161, %p162
      %p164 = scmp.le.s32.totalorder 1, %s20
      %p165 = scmp.lt.s32.totalorder %s20, 5
      %p166 = pnand %p164, %p165
      %p167 = pneg %p166
      // Predicated region
      $region9: #{tpu_custom_call.1} parent=5 // pred_check
        _
      $region10: #{tpu_custom_call.1} parent=5 // pred_check_branch
        %169 = sbr.rel (%p166) target = $region12
      $region11: #{tpu_custom_call.1} parent=5 // pred_region
        %s170 = ssub.s32 %s20, 1
        // Predicated region
        $region13: #{tpu_custom_call.1} parent=11 // pred_check
          %p171 = pneg %p109
        $region14: #{tpu_custom_call.1} parent=11 // pred_check_branch
          %173 = sbr.rel (%p171) target = $region16
        $region15: #{tpu_custom_call.1} parent=11 // pred_region
          _
        $region16: #{tpu_custom_call.1} parent=11 // pred_fallthru
          _
        // Predicated region
        $region17: #{tpu_custom_call.1} parent=11 // pred_check
          %p174 = pneg %p130
        $region18: #{tpu_custom_call.1} parent=11 // pred_check_branch
          %176 = sbr.rel (%p174) target = $region20
        $region19: #{tpu_custom_call.1} parent=11 // pred_region
          _
        $region20: #{tpu_custom_call.1} parent=11 // pred_fallthru
          _
      $region12: #{tpu_custom_call.1} parent=5 // pred_fallthru
        _
      %p177 = scmp.lt.s32.totalorder %s20, 4
      // Predicated region
      $region21: #{tpu_custom_call.1} parent=5 // pred_check
        %p178 = pneg %p177
      $region22: #{tpu_custom_call.1} parent=5 // pred_check_branch
        %180 = sbr.rel (%p178) target = $region24
      $region23: #{tpu_custom_call.1} parent=5 // pred_region
        // Predicated region
        $region25: #{tpu_custom_call.1} parent=23 // pred_check
          %p181 = pneg %p54
        $region26: #{tpu_custom_call.1} parent=23 // pred_check_branch
          %183 = sbr.rel (%p181) target = $region28
        $region27: #{tpu_custom_call.1} parent=23 // pred_region
          #allocation12 [shape = 'u32[6]{0}', space=smem, size = 0x18, scoped, tag = 'DMA stride descriptor']
          %s184 = sand.u32 %s44, 1
          %s185 = scalar_lea.sflag [#allocation6], %s184
          %s186 = sand.u32 %s44, 1
          %s187 = smul.addr %s186, 512
          %s188 = scalar_lea.vmem [#allocation5], %s187
          %s189 = smul.u32 8, %s27
          %s190 = smul.u32 16, %s28
          %s192 = ssub.s32 8192, 8192
          %193 = vsyncadd %s185, %s192
          %s194 = smul.addr %s189, 32
          %s195 = sadd.s32 %s190, %s194
          %s196 = smul.addr %s195, 64
          %s197 = scalar_lea.hbm %s0, %s196
          %s199 = sshll.u32 1, 14
          %s200 = sxor.u32 4294967295, %s199
          %s202 = sld [smem:[#allocation0]]
          %s203 = sadd.s32 2, %s202
          %s205 = sshll.u32 7, 26
          %s206 = sxor.u32 4294967295, %s205
          %s207 = sand.u32 0, %s206
          %s208 = sshll.u32 %s203, 26
          %s209 = sor.u32 %s207, %s208
          %s210 = sshll.u32 %s188, 4
          %s211 = int_to_ptr.vmem [resolvable:$true] %s210
          %217 = sst [smem:[#allocation12]] 2048
          %s218 = scalar_lea.smem [#allocation12], 1
          %219 = sst [smem:[%s218]] 1024
          %s220 = scalar_lea.smem [#allocation12], 2
          %221 = sst [smem:[%s220]] 16
          %s222 = scalar_lea.smem [#allocation12], 3
          %223 = sst [smem:[%s222]] 64
          %s224 = scalar_lea.smem [#allocation12], 4
          %225 = sst [smem:[%s224]] 64
          %s226 = scalar_lea.smem [#allocation12], 5
          %227 = sst [smem:[%s226]] 4
          %229 = dma.general %s197, 8192, %s211, %s185, [#allocation11], [#allocation12], %s209, 0
        $region28: #{tpu_custom_call.1} parent=23 // pred_fallthru
          _
        // Predicated region
        $region29: #{tpu_custom_call.1} parent=23 // pred_check
          %p230 = pneg %p82
        $region30: #{tpu_custom_call.1} parent=23 // pred_check_branch
          %232 = sbr.rel (%p230) target = $region32
        $region31: #{tpu_custom_call.1} parent=23 // pred_region
          %s233 = sand.u32 %s72, 1
          %s234 = scalar_lea.sflag [#allocation9], %s233
          %s235 = sand.u32 %s72, 1
          %s236 = smul.addr %s235, 8
          %s237 = scalar_lea.vmem [#allocation8], %s236
          %s238 = smul.u32 8, %s27
          %s240 = ssub.s32 128, 128
          %241 = vsyncadd %s234, %s240
          %s242 = smul.addr %s238, 2
          %s243 = sadd.s32 %s28, %s242
          %s244 = smul.addr %s243, 16
          %s245 = scalar_lea.hbm %s1, %s244
          %s246 = sshll.u32 %s237, 4
          %s247 = int_to_ptr.vmem [resolvable:$true] %s246
          %252 = dma.hbm_to_vmem [thread:$0]  %s245, 128, %s247, %s234, 32, 16, 1
        $region32: #{tpu_custom_call.1} parent=23 // pred_fallthru
          _
      $region24: #{tpu_custom_call.1} parent=5 // pred_fallthru
        _
      %p253 = scmp.le.s32.totalorder 1, %s20
      %p254 = scmp.lt.s32.totalorder %s20, 5
      %p255 = pnand %p253, %p254
      %p256 = pneg %p255
      // Predicated region
      $region33: #{tpu_custom_call.1} parent=5 // pred_check
        _
      $region34: #{tpu_custom_call.1} parent=5 // pred_check_branch
        %258 = sbr.rel (%p255) target = $region36
      $region35: #{tpu_custom_call.1} parent=5 // pred_region
        %s259 = ssub.s32 %s20, 1
        %s260 = sand.u32 %s47, 1
        %s261 = scalar_lea.sflag [#allocation6], %s260
        %s262 = sand.u32 %s47, 1
        %s263 = smul.addr %s262, 512
        %s264 = scalar_lea.vmem [#allocation5], %s263
        // Predicated region
        $region37: #{tpu_custom_call.1} parent=35 // pred_check
          %p265 = pneg %p60
        $region38: #{tpu_custom_call.1} parent=35 // pred_check_branch
          %267 = sbr.rel (%p265) target = $region40
        $region39: #{tpu_custom_call.1} parent=35 // pred_region
          %268 = dma.done %s261, 8192
        $region40: #{tpu_custom_call.1} parent=35 // pred_fallthru
          _
        %s269 = sand.u32 %s75, 1
        %s270 = scalar_lea.sflag [#allocation9], %s269
        %s271 = sand.u32 %s75, 1
        %s272 = smul.addr %s271, 8
        %s273 = scalar_lea.vmem [#allocation8], %s272
        // Predicated region
        $region41: #{tpu_custom_call.1} parent=35 // pred_check
          %p274 = pneg %p88
        $region42: #{tpu_custom_call.1} parent=35 // pred_check_branch
          %276 = sbr.rel (%p274) target = $region44
        $region43: #{tpu_custom_call.1} parent=35 // pred_region
          %277 = dma.done %s270, 128
        $region44: #{tpu_custom_call.1} parent=35 // pred_fallthru
          _
        %s278 = sand.u32 %s47, 1
        %s279 = scalar_lea.sflag [#allocation6], %s278
        %s280 = sand.u32 %s47, 1
        %s281 = smul.addr %s280, 512
        %s282 = scalar_lea.vmem [#allocation5], %s281
        %p283 = pneg %p60
        %p284 = pneg %p57
        %s285 = sand.u32 %s75, 1
        %s286 = scalar_lea.sflag [#allocation9], %s285
        %s287 = sand.u32 %s75, 1
        %s288 = smul.addr %s287, 8
        %s289 = scalar_lea.vmem [#allocation8], %s288
        %p290 = pneg %p88
        %p291 = pneg %p85
        %p292 = pneg %p109
        %p293 = pneg %p106
        %p294 = pneg %p130
        %p295 = pneg %p127
        %p296 = pneg %p156
        %p297 = pneg %p153
        %s298 = sand.u32 %s143, 1
        %s299 = scalar_lea.sflag [#allocation7], %s298
        %s300 = sand.u32 %s143, 1
        %s301 = scalar_lea.vmem [#allocation10], %s300
        %s302 = smul.u32 8, %s29
        %s303 = smul.u32 16, %s30
        %s304 = smul.u32 8, %s29
        %p306 = scmp.eq.s32.totalorder %s30, 0
        // Predicated region
        $region45: #{tpu_custom_call.1} parent=35 // pred_check
          %p307 = pneg %p306
        $region46: #{tpu_custom_call.1} parent=35 // pred_check_branch
          %309 = sbr.rel (%p307) target = $region48
        $region47: #{tpu_custom_call.1} parent=35 // pred_region
          %310 = vst [vmem:[#allocation2] sm:$0x1] 0.0
          %311 = vst [vmem:[#allocation2 + $0x1] sm:$0x1] 0.0
          %312 = vst [vmem:[#allocation2 + $0x2] sm:$0x1] 0.0
          %313 = vst [vmem:[#allocation2 + $0x3] sm:$0x1] 0.0
          %314 = vst [vmem:[#allocation2 + $0x4] sm:$0x1] 0.0
          %315 = vst [vmem:[#allocation2 + $0x5] sm:$0x1] 0.0
          %316 = vst [vmem:[#allocation2 + $0x6] sm:$0x1] 0.0
          %317 = vst [vmem:[#allocation2 + $0x7] sm:$0x1] 0.0
          %vm318 = vcmask 7168
          %319 = vst.msk [vmem:[#allocation3] sm:$0xff] %vm318, 0.0
        $region48: #{tpu_custom_call.1} parent=35 // pred_fallthru
          _
        %v320 = vld [vmem:[%s264] sm:$0xf]
        %v321 = vld [vmem:[%s264 + $0x4] sm:$0xf]
        %v322 = vld [vmem:[%s264 + $0x8] sm:$0xf]
        %v323 = vld [vmem:[%s264 + $0xc] sm:$0xf]
        %v324 = vld [vmem:[%s264 + $0x10] sm:$0xf]
        %v325 = vld [vmem:[%s264 + $0x14] sm:$0xf]
        %v326 = vld [vmem:[%s264 + $0x18] sm:$0xf]
        %v327 = vld [vmem:[%s264 + $0x1c] sm:$0xf]
        %v328 = vld [vmem:[%s264 + $0x20] sm:$0xf]
        %v329 = vld [vmem:[%s264 + $0x24] sm:$0xf]
        %v330 = vld [vmem:[%s264 + $0x28] sm:$0xf]
        %v331 = vld [vmem:[%s264 + $0x2c] sm:$0xf]
        %v332 = vld [vmem:[%s264 + $0x30] sm:$0xf]
        %v333 = vld [vmem:[%s264 + $0x34] sm:$0xf]
        %v334 = vld [vmem:[%s264 + $0x38] sm:$0xf]
        %v335 = vld [vmem:[%s264 + $0x3c] sm:$0xf]
        %v336 = vld [vmem:[%s264 + $0x40] sm:$0xf]
        %v337 = vld [vmem:[%s264 + $0x44] sm:$0xf]
        %v338 = vld [vmem:[%s264 + $0x48] sm:$0xf]
        %v339 = vld [vmem:[%s264 + $0x4c] sm:$0xf]
        %v340 = vld [vmem:[%s264 + $0x50] sm:$0xf]
        %v341 = vld [vmem:[%s264 + $0x54] sm:$0xf]
        %v342 = vld [vmem:[%s264 + $0x58] sm:$0xf]
        %v343 = vld [vmem:[%s264 + $0x5c] sm:$0xf]
        %v344 = vld [vmem:[%s264 + $0x60] sm:$0xf]
        %v345 = vld [vmem:[%s264 + $0x64] sm:$0xf]
        %v346 = vld [vmem:[%s264 + $0x68] sm:$0xf]
        %v347 = vld [vmem:[%s264 + $0x6c] sm:$0xf]
        %v348 = vld [vmem:[%s264 + $0x70] sm:$0xf]
        %v349 = vld [vmem:[%s264 + $0x74] sm:$0xf]
        %v350 = vld [vmem:[%s264 + $0x78] sm:$0xf]
        %v351 = vld [vmem:[%s264 + $0x7c] sm:$0xf]
        %v352 = vld [vmem:[%s264 + $0x80] sm:$0xf]
        %v353 = vld [vmem:[%s264 + $0x84] sm:$0xf]
        %v354 = vld [vmem:[%s264 + $0x88] sm:$0xf]
        %v355 = vld [vmem:[%s264 + $0x8c] sm:$0xf]
        %v356 = vld [vmem:[%s264 + $0x90] sm:$0xf]
        %v357 = vld [vmem:[%s264 + $0x94] sm:$0xf]
        %v358 = vld [vmem:[%s264 + $0x98] sm:$0xf]
        %v359 = vld [vmem:[%s264 + $0x9c] sm:$0xf]
        %v360 = vld [vmem:[%s264 + $0xa0] sm:$0xf]
        %v361 = vld [vmem:[%s264 + $0xa4] sm:$0xf]
        %v362 = vld [vmem:[%s264 + $0xa8] sm:$0xf]
        %v363 = vld [vmem:[%s264 + $0xac] sm:$0xf]
        %v364 = vld [vmem:[%s264 + $0xb0] sm:$0xf]
        %v365 = vld [vmem:[%s264 + $0xb4] sm:$0xf]
        %v366 = vld [vmem:[%s264 + $0xb8] sm:$0xf]
        %v367 = vld [vmem:[%s264 + $0xbc] sm:$0xf]
        %v368 = vld [vmem:[%s264 + $0xc0] sm:$0xf]
        %v369 = vld [vmem:[%s264 + $0xc4] sm:$0xf]
        %v370 = vld [vmem:[%s264 + $0xc8] sm:$0xf]
        %v371 = vld [vmem:[%s264 + $0xcc] sm:$0xf]
        %v372 = vld [vmem:[%s264 + $0xd0] sm:$0xf]
        %v373 = vld [vmem:[%s264 + $0xd4] sm:$0xf]
        %v374 = vld [vmem:[%s264 + $0xd8] sm:$0xf]
        %v375 = vld [vmem:[%s264 + $0xdc] sm:$0xf]
        %v376 = vld [vmem:[%s264 + $0xe0] sm:$0xf]
        %v377 = vld [vmem:[%s264 + $0xe4] sm:$0xf]
        %v378 = vld [vmem:[%s264 + $0xe8] sm:$0xf]
        %v379 = vld [vmem:[%s264 + $0xec] sm:$0xf]
        %v380 = vld [vmem:[%s264 + $0xf0] sm:$0xf]
        %v381 = vld [vmem:[%s264 + $0xf4] sm:$0xf]
        %v382 = vld [vmem:[%s264 + $0xf8] sm:$0xf]
        %v383 = vld [vmem:[%s264 + $0xfc] sm:$0xf]
        %v384 = vld [vmem:[%s264 + $0x100] sm:$0xf]
        %v385 = vld [vmem:[%s264 + $0x104] sm:$0xf]
        %v386 = vld [vmem:[%s264 + $0x108] sm:$0xf]
        %v387 = vld [vmem:[%s264 + $0x10c] sm:$0xf]
        %v388 = vld [vmem:[%s264 + $0x110] sm:$0xf]
        %v389 = vld [vmem:[%s264 + $0x114] sm:$0xf]
        %v390 = vld [vmem:[%s264 + $0x118] sm:$0xf]
        %v391 = vld [vmem:[%s264 + $0x11c] sm:$0xf]
        %v392 = vld [vmem:[%s264 + $0x120] sm:$0xf]
        %v393 = vld [vmem:[%s264 + $0x124] sm:$0xf]
        %v394 = vld [vmem:[%s264 + $0x128] sm:$0xf]
        %v395 = vld [vmem:[%s264 + $0x12c] sm:$0xf]
        %v396 = vld [vmem:[%s264 + $0x130] sm:$0xf]
        %v397 = vld [vmem:[%s264 + $0x134] sm:$0xf]
        %v398 = vld [vmem:[%s264 + $0x138] sm:$0xf]
        %v399 = vld [vmem:[%s264 + $0x13c] sm:$0xf]
        %v400 = vld [vmem:[%s264 + $0x140] sm:$0xf]
        %v401 = vld [vmem:[%s264 + $0x144] sm:$0xf]
        %v402 = vld [vmem:[%s264 + $0x148] sm:$0xf]
        %v403 = vld [vmem:[%s264 + $0x14c] sm:$0xf]
        %v404 = vld [vmem:[%s264 + $0x150] sm:$0xf]
        %v405 = vld [vmem:[%s264 + $0x154] sm:$0xf]
        %v406 = vld [vmem:[%s264 + $0x158] sm:$0xf]
        %v407 = vld [vmem:[%s264 + $0x15c] sm:$0xf]
        %v408 = vld [vmem:[%s264 + $0x160] sm:$0xf]
        %v409 = vld [vmem:[%s264 + $0x164] sm:$0xf]
        %v410 = vld [vmem:[%s264 + $0x168] sm:$0xf]
        %v411 = vld [vmem:[%s264 + $0x16c] sm:$0xf]
        %v412 = vld [vmem:[%s264 + $0x170] sm:$0xf]
        %v413 = vld [vmem:[%s264 + $0x174] sm:$0xf]
        %v414 = vld [vmem:[%s264 + $0x178] sm:$0xf]
        %v415 = vld [vmem:[%s264 + $0x17c] sm:$0xf]
        %v416 = vld [vmem:[%s264 + $0x180] sm:$0xf]
        %v417 = vld [vmem:[%s264 + $0x184] sm:$0xf]
        %v418 = vld [vmem:[%s264 + $0x188] sm:$0xf]
        %v419 = vld [vmem:[%s264 + $0x18c] sm:$0xf]
        %v420 = vld [vmem:[%s264 + $0x190] sm:$0xf]
        %v421 = vld [vmem:[%s264 + $0x194] sm:$0xf]
        %v422 = vld [vmem:[%s264 + $0x198] sm:$0xf]
        %v423 = vld [vmem:[%s264 + $0x19c] sm:$0xf]
        %v424 = vld [vmem:[%s264 + $0x1a0] sm:$0xf]
        %v425 = vld [vmem:[%s264 + $0x1a4] sm:$0xf]
        %v426 = vld [vmem:[%s264 + $0x1a8] sm:$0xf]
        %v427 = vld [vmem:[%s264 + $0x1ac] sm:$0xf]
        %v428 = vld [vmem:[%s264 + $0x1b0] sm:$0xf]
        %v429 = vld [vmem:[%s264 + $0x1b4] sm:$0xf]
        %v430 = vld [vmem:[%s264 + $0x1b8] sm:$0xf]
        %v431 = vld [vmem:[%s264 + $0x1bc] sm:$0xf]
        %v432 = vld [vmem:[%s264 + $0x1c0] sm:$0xf]
        %v433 = vld [vmem:[%s264 + $0x1c4] sm:$0xf]
        %v434 = vld [vmem:[%s264 + $0x1c8] sm:$0xf]
        %v435 = vld [vmem:[%s264 + $0x1cc] sm:$0xf]
        %v436 = vld [vmem:[%s264 + $0x1d0] sm:$0xf]
        %v437 = vld [vmem:[%s264 + $0x1d4] sm:$0xf]
        %v438 = vld [vmem:[%s264 + $0x1d8] sm:$0xf]
        %v439 = vld [vmem:[%s264 + $0x1dc] sm:$0xf]
        %v440 = vld [vmem:[%s264 + $0x1e0] sm:$0xf]
        %v441 = vld [vmem:[%s264 + $0x1e4] sm:$0xf]
        %v442 = vld [vmem:[%s264 + $0x1e8] sm:$0xf]
        %v443 = vld [vmem:[%s264 + $0x1ec] sm:$0xf]
        %v444 = vld [vmem:[%s264 + $0x1f0] sm:$0xf]
        %v445 = vld [vmem:[%s264 + $0x1f4] sm:$0xf]
        %v446 = vld [vmem:[%s264 + $0x1f8] sm:$0xf]
        %v447 = vld [vmem:[%s264 + $0x1fc] sm:$0xf]
        %v448 = vld [vmem:[%s273] sm:$0x1]
        %v449 = vld [vmem:[%s273 + $0x1] sm:$0x1]
        %v450 = vld [vmem:[%s273 + $0x2] sm:$0x1]
        %v451 = vld [vmem:[%s273 + $0x3] sm:$0x1]
        %v452 = vld [vmem:[%s273 + $0x4] sm:$0x1]
        %v453 = vld [vmem:[%s273 + $0x5] sm:$0x1]
        %v454 = vld [vmem:[%s273 + $0x6] sm:$0x1]
        %v455 = vld [vmem:[%s273 + $0x7] sm:$0x1]
        %v456 = vcvt.s32.f32 %v448
        %v457 = vcvt.s32.f32 %v449
        %v458 = vcvt.s32.f32 %v450
        %v459 = vcvt.s32.f32 %v451
        %v460 = vcvt.s32.f32 %v452
        %v461 = vcvt.s32.f32 %v453
        %v462 = vcvt.s32.f32 %v454
        %v463 = vcvt.s32.f32 %v455
        %v464 = vpack.c.bf16 %v456, %v456
        %v465 = vpack.c.bf16 %v457, %v457
        %v466 = vpack.c.bf16 %v458, %v458
        %v467 = vpack.c.bf16 %v459, %v459
        %v468 = vpack.c.bf16 %v460, %v460
        %v469 = vpack.c.bf16 %v461, %v461
        %v470 = vpack.c.bf16 %v462, %v462
        %v471 = vpack.c.bf16 %v463, %v463
        %v472 = vld [vmem:[#allocation2] sm:$0x1]
        %v473 = vld [vmem:[#allocation2 + $0x1] sm:$0x1]
        %v474 = vld [vmem:[#allocation2 + $0x2] sm:$0x1]
        %v475 = vld [vmem:[#allocation2 + $0x3] sm:$0x1]
        %v476 = vld [vmem:[#allocation2 + $0x4] sm:$0x1]
        %v477 = vld [vmem:[#allocation2 + $0x5] sm:$0x1]
        %v478 = vld [vmem:[#allocation2 + $0x6] sm:$0x1]
        %v479 = vld [vmem:[#allocation2 + $0x7] sm:$0x1]
        %v496 = vunpack.c.l.b16 %v320
        %v497 = vunpack.c.l.b16 %v321
        %v498 = vunpack.c.l.b16 %v322
        %v499 = vunpack.c.l.b16 %v323
        %v500 = vunpack.c.l.b16 %v324
        %v501 = vunpack.c.l.b16 %v325
        %v502 = vunpack.c.l.b16 %v326
        %v503 = vunpack.c.l.b16 %v327
        %v504 = vunpack.c.l.b16 %v328
        %v505 = vunpack.c.l.b16 %v329
        %v506 = vunpack.c.l.b16 %v330
        %v507 = vunpack.c.l.b16 %v331
        %v508 = vunpack.c.l.b16 %v332
        %v509 = vunpack.c.l.b16 %v333
        %v510 = vunpack.c.l.b16 %v334
        %v511 = vunpack.c.l.b16 %v335
        %v512 = vpack.c.b16 %v497, %v496
        %v513 = vpack.c.b16 %v499, %v498
        %v514 = vpack.c.b16 %v501, %v500
        %v515 = vpack.c.b16 %v503, %v502
        %v516 = vpack.c.b16 %v505, %v504
        %v517 = vpack.c.b16 %v507, %v506
        %v518 = vpack.c.b16 %v509, %v508
        %v519 = vpack.c.b16 %v511, %v510
        %528 = vmatprep.subr.bf16.mxu0 0
        %529 = vmatpush1.bf16.msra.mxu0 %v512
        %530 = vmatprep.subr.bf16.mxu0 0
        %531 = vmatpush1.bf16.msra.mxu0 %v513
        %532 = vmatprep.subr.bf16.mxu0 0
        %533 = vmatpush1.bf16.msra.mxu0 %v514
        %534 = vmatprep.subr.bf16.mxu0 0
        %535 = vmatpush1.bf16.msra.mxu0 %v515
        %536 = vmatprep.subr.bf16.mxu0 0
        %537 = vmatpush1.bf16.msra.mxu0 %v516
        %538 = vmatprep.subr.bf16.mxu0 0
        %539 = vmatpush1.bf16.msra.mxu0 %v517
        %540 = vmatprep.subr.bf16.mxu0 0
        %541 = vmatpush1.bf16.msra.mxu0 %v518
        %542 = vmatprep.subr.bf16.mxu0 0
        %543 = vmatpush1.bf16.msra.mxu0 %v519
        %544 = vmatprep.subr.bf16.mxu0 0
        %545 = vmatpush1.bf16.msra.mxu0 0
        %546 = vmatprep.subr.bf16.mxu0 0
        %547 = vmatpush1.bf16.msra.mxu0 0
        %548 = vmatprep.subr.bf16.mxu0 0
        %549 = vmatpush1.bf16.msra.mxu0 0
        %550 = vmatprep.subr.bf16.mxu0 0
        %551 = vmatpush1.bf16.msra.mxu0 0
        %552 = vmatprep.subr.bf16.mxu0 0
        %553 = vmatpush1.bf16.msra.mxu0 0
        %554 = vmatprep.subr.bf16.mxu0 0
        %555 = vmatpush1.bf16.msra.mxu0 0
        %556 = vmatprep.subr.bf16.mxu0 0
        %557 = vmatpush1.bf16.msra.mxu0 0
        %558 = vmatprep.subr.bf16.mxu0 0
        %559 = vmatpush1.bf16.msra.mxu0 0
        %560 = vmatprep.mubr.bf16.mxu0 0
        %561 = vmatmul.mubr.bf16.gmra.mrb[0].mxu0 %v464
        %v562 = vpop.f32.mrb[0].mxu0
        %v563 = vadd.f32 0.0, %v562
        %v564 = vpop.f32.mrb[0].mxu0
        %v565 = vpop.f32.mrb[0].mxu0
        %v566 = vpop.f32.mrb[0].mxu0
        %567 = vdwg.mxu0
        %v584 = vunpack.c.l.b16 %v336
        %v585 = vunpack.c.l.b16 %v337
        %v586 = vunpack.c.l.b16 %v338
        %v587 = vunpack.c.l.b16 %v339
        %v588 = vunpack.c.l.b16 %v340
        %v589 = vunpack.c.l.b16 %v341
        %v590 = vunpack.c.l.b16 %v342
        %v591 = vunpack.c.l.b16 %v343
        %v592 = vunpack.c.l.b16 %v344
        %v593 = vunpack.c.l.b16 %v345
        %v594 = vunpack.c.l.b16 %v346
        %v595 = vunpack.c.l.b16 %v347
        %v596 = vunpack.c.l.b16 %v348
        %v597 = vunpack.c.l.b16 %v349
        %v598 = vunpack.c.l.b16 %v350
        %v599 = vunpack.c.l.b16 %v351
        %v600 = vpack.c.b16 %v585, %v584
        %v601 = vpack.c.b16 %v587, %v586
        %v602 = vpack.c.b16 %v589, %v588
        %v603 = vpack.c.b16 %v591, %v590
        %v604 = vpack.c.b16 %v593, %v592
        %v605 = vpack.c.b16 %v595, %v594
        %v606 = vpack.c.b16 %v597, %v596
        %v607 = vpack.c.b16 %v599, %v598
        %616 = vmatprep.subr.bf16.mxu0 0
        %617 = vmatpush1.bf16.msra.mxu0 %v600
        %618 = vmatprep.subr.bf16.mxu0 0
        %619 = vmatpush1.bf16.msra.mxu0 %v601
        %620 = vmatprep.subr.bf16.mxu0 0
        %621 = vmatpush1.bf16.msra.mxu0 %v602
        %622 = vmatprep.subr.bf16.mxu0 0
        %623 = vmatpush1.bf16.msra.mxu0 %v603
        %624 = vmatprep.subr.bf16.mxu0 0
        %625 = vmatpush1.bf16.msra.mxu0 %v604
        %626 = vmatprep.subr.bf16.mxu0 0
        %627 = vmatpush1.bf16.msra.mxu0 %v605
        %628 = vmatprep.subr.bf16.mxu0 0
        %629 = vmatpush1.bf16.msra.mxu0 %v606
        %630 = vmatprep.subr.bf16.mxu0 0
        %631 = vmatpush1.bf16.msra.mxu0 %v607
        %632 = vmatprep.subr.bf16.mxu0 0
        %633 = vmatpush1.bf16.msra.mxu0 0
        %634 = vmatprep.subr.bf16.mxu0 0
        %635 = vmatpush1.bf16.msra.mxu0 0
        %636 = vmatprep.subr.bf16.mxu0 0
        %637 = vmatpush1.bf16.msra.mxu0 0
        %638 = vmatprep.subr.bf16.mxu0 0
        %639 = vmatpush1.bf16.msra.mxu0 0
        %640 = vmatprep.subr.bf16.mxu0 0
        %641 = vmatpush1.bf16.msra.mxu0 0
        %642 = vmatprep.subr.bf16.mxu0 0
        %643 = vmatpush1.bf16.msra.mxu0 0
        %644 = vmatprep.subr.bf16.mxu0 0
        %645 = vmatpush1.bf16.msra.mxu0 0
        %646 = vmatprep.subr.bf16.mxu0 0
        %647 = vmatpush1.bf16.msra.mxu0 0
        %648 = vmatprep.mubr.bf16.mxu0 0
        %649 = vmatmul.mubr.bf16.gmra.mrb[0].mxu0 %v465
        %v650 = vpop.f32.mrb[0].mxu0
        %v651 = vadd.f32 0.0, %v650
        %v652 = vpop.f32.mrb[0].mxu0
        %v653 = vpop.f32.mrb[0].mxu0
        %v654 = vpop.f32.mrb[0].mxu0
        %655 = vdwg.mxu0
        %v672 = vunpack.c.l.b16 %v352
        %v673 = vunpack.c.l.b16 %v353
        %v674 = vunpack.c.l.b16 %v354
        %v675 = vunpack.c.l.b16 %v355
        %v676 = vunpack.c.l.b16 %v356
        %v677 = vunpack.c.l.b16 %v357
        %v678 = vunpack.c.l.b16 %v358
        %v679 = vunpack.c.l.b16 %v359
        %v680 = vunpack.c.l.b16 %v360
        %v681 = vunpack.c.l.b16 %v361
        %v682 = vunpack.c.l.b16 %v362
        %v683 = vunpack.c.l.b16 %v363
        %v684 = vunpack.c.l.b16 %v364
        %v685 = vunpack.c.l.b16 %v365
        %v686 = vunpack.c.l.b16 %v366
        %v687 = vunpack.c.l.b16 %v367
        %v688 = vpack.c.b16 %v673, %v672
        %v689 = vpack.c.b16 %v675, %v674
        %v690 = vpack.c.b16 %v677, %v676
        %v691 = vpack.c.b16 %v679, %v678
        %v692 = vpack.c.b16 %v681, %v680
        %v693 = vpack.c.b16 %v683, %v682
        %v694 = vpack.c.b16 %v685, %v684
        %v695 = vpack.c.b16 %v687, %v686
        %704 = vmatprep.subr.bf16.mxu0 0
        %705 = vmatpush1.bf16.msra.mxu0 %v688
        %706 = vmatprep.subr.bf16.mxu0 0
        %707 = vmatpush1.bf16.msra.mxu0 %v689
        %708 = vmatprep.subr.bf16.mxu0 0
        %709 = vmatpush1.bf16.msra.mxu0 %v690
        %710 = vmatprep.subr.bf16.mxu0 0
        %711 = vmatpush1.bf16.msra.mxu0 %v691
        %712 = vmatprep.subr.bf16.mxu0 0
        %713 = vmatpush1.bf16.msra.mxu0 %v692
        %714 = vmatprep.subr.bf16.mxu0 0
        %715 = vmatpush1.bf16.msra.mxu0 %v693
        %716 = vmatprep.subr.bf16.mxu0 0
        %717 = vmatpush1.bf16.msra.mxu0 %v694
        %718 = vmatprep.subr.bf16.mxu0 0
        %719 = vmatpush1.bf16.msra.mxu0 %v695
        %720 = vmatprep.subr.bf16.mxu0 0
        %721 = vmatpush1.bf16.msra.mxu0 0
        %722 = vmatprep.subr.bf16.mxu0 0
        %723 = vmatpush1.bf16.msra.mxu0 0
        %724 = vmatprep.subr.bf16.mxu0 0
        %725 = vmatpush1.bf16.msra.mxu0 0
        %726 = vmatprep.subr.bf16.mxu0 0
        %727 = vmatpush1.bf16.msra.mxu0 0
        %728 = vmatprep.subr.bf16.mxu0 0
        %729 = vmatpush1.bf16.msra.mxu0 0
        %730 = vmatprep.subr.bf16.mxu0 0
        %731 = vmatpush1.bf16.msra.mxu0 0
        %732 = vmatprep.subr.bf16.mxu0 0
        %733 = vmatpush1.bf16.msra.mxu0 0
        %734 = vmatprep.subr.bf16.mxu0 0
        %735 = vmatpush1.bf16.msra.mxu0 0
        %736 = vmatprep.mubr.bf16.mxu0 0
        %737 = vmatmul.mubr.bf16.gmra.mrb[0].mxu0 %v466
        %v738 = vpop.f32.mrb[0].mxu0
        %v739 = vadd.f32 0.0, %v738
        %v740 = vpop.f32.mrb[0].mxu0
        %v741 = vpop.f32.mrb[0].mxu0
        %v742 = vpop.f32.mrb[0].mxu0
        %743 = vdwg.mxu0
        %v760 = vunpack.c.l.b16 %v368
        %v761 = vunpack.c.l.b16 %v369
        %v762 = vunpack.c.l.b16 %v370
        %v763 = vunpack.c.l.b16 %v371
        %v764 = vunpack.c.l.b16 %v372
        %v765 = vunpack.c.l.b16 %v373
        %v766 = vunpack.c.l.b16 %v374
        %v767 = vunpack.c.l.b16 %v375
        %v768 = vunpack.c.l.b16 %v376
        %v769 = vunpack.c.l.b16 %v377
        %v770 = vunpack.c.l.b16 %v378
        %v771 = vunpack.c.l.b16 %v379
        %v772 = vunpack.c.l.b16 %v380
        %v773 = vunpack.c.l.b16 %v381
        %v774 = vunpack.c.l.b16 %v382
        %v775 = vunpack.c.l.b16 %v383
        %v776 = vpack.c.b16 %v761, %v760
        %v777 = vpack.c.b16 %v763, %v762
        %v778 = vpack.c.b16 %v765, %v764
        %v779 = vpack.c.b16 %v767, %v766
        %v780 = vpack.c.b16 %v769, %v768
        %v781 = vpack.c.b16 %v771, %v770
        %v782 = vpack.c.b16 %v773, %v772
        %v783 = vpack.c.b16 %v775, %v774
        %792 = vmatprep.subr.bf16.mxu0 0
        %793 = vmatpush1.bf16.msra.mxu0 %v776
        %794 = vmatprep.subr.bf16.mxu0 0
        %795 = vmatpush1.bf16.msra.mxu0 %v777
        %796 = vmatprep.subr.bf16.mxu0 0
        %797 = vmatpush1.bf16.msra.mxu0 %v778
        %798 = vmatprep.subr.bf16.mxu0 0
        %799 = vmatpush1.bf16.msra.mxu0 %v779
        %800 = vmatprep.subr.bf16.mxu0 0
        %801 = vmatpush1.bf16.msra.mxu0 %v780
        %802 = vmatprep.subr.bf16.mxu0 0
        %803 = vmatpush1.bf16.msra.mxu0 %v781
        %804 = vmatprep.subr.bf16.mxu0 0
        %805 = vmatpush1.bf16.msra.mxu0 %v782
        %806 = vmatprep.subr.bf16.mxu0 0
        %807 = vmatpush1.bf16.msra.mxu0 %v783
        %808 = vmatprep.subr.bf16.mxu0 0
        %809 = vmatpush1.bf16.msra.mxu0 0
        %810 = vmatprep.subr.bf16.mxu0 0
        %811 = vmatpush1.bf16.msra.mxu0 0
        %812 = vmatprep.subr.bf16.mxu0 0
        %813 = vmatpush1.bf16.msra.mxu0 0
        %814 = vmatprep.subr.bf16.mxu0 0
        %815 = vmatpush1.bf16.msra.mxu0 0
        %816 = vmatprep.subr.bf16.mxu0 0
        %817 = vmatpush1.bf16.msra.mxu0 0
        %818 = vmatprep.subr.bf16.mxu0 0
        %819 = vmatpush1.bf16.msra.mxu0 0
        %820 = vmatprep.subr.bf16.mxu0 0
        %821 = vmatpush1.bf16.msra.mxu0 0
        %822 = vmatprep.subr.bf16.mxu0 0
        %823 = vmatpush1.bf16.msra.mxu0 0
        %824 = vmatprep.mubr.bf16.mxu0 0
        %825 = vmatmul.mubr.bf16.gmra.mrb[0].mxu0 %v467
        %v826 = vpop.f32.mrb[0].mxu0
        %v827 = vadd.f32 0.0, %v826
        %v828 = vpop.f32.mrb[0].mxu0
        %v829 = vpop.f32.mrb[0].mxu0
        %v830 = vpop.f32.mrb[0].mxu0
        %831 = vdwg.mxu0
        %v848 = vunpack.c.l.b16 %v384
        %v849 = vunpack.c.l.b16 %v385
        %v850 = vunpack.c.l.b16 %v386
        %v851 = vunpack.c.l.b16 %v387
        %v852 = vunpack.c.l.b16 %v388
        %v853 = vunpack.c.l.b16 %v389
        %v854 = vunpack.c.l.b16 %v390
        %v855 = vunpack.c.l.b16 %v391
        %v856 = vunpack.c.l.b16 %v392
        %v857 = vunpack.c.l.b16 %v393
        %v858 = vunpack.c.l.b16 %v394
        %v859 = vunpack.c.l.b16 %v395
        %v860 = vunpack.c.l.b16 %v396
        %v861 = vunpack.c.l.b16 %v397
        %v862 = vunpack.c.l.b16 %v398
        %v863 = vunpack.c.l.b16 %v399
        %v864 = vpack.c.b16 %v849, %v848
        %v865 = vpack.c.b16 %v851, %v850
        %v866 = vpack.c.b16 %v853, %v852
        %v867 = vpack.c.b16 %v855, %v854
        %v868 = vpack.c.b16 %v857, %v856
        %v869 = vpack.c.b16 %v859, %v858
        %v870 = vpack.c.b16 %v861, %v860
        %v871 = vpack.c.b16 %v863, %v862
        %880 = vmatprep.subr.bf16.mxu0 0
        %881 = vmatpush1.bf16.msra.mxu0 %v864
        %882 = vmatprep.subr.bf16.mxu0 0
        %883 = vmatpush1.bf16.msra.mxu0 %v865
        %884 = vmatprep.subr.bf16.mxu0 0
        %885 = vmatpush1.bf16.msra.mxu0 %v866
        %886 = vmatprep.subr.bf16.mxu0 0
        %887 = vmatpush1.bf16.msra.mxu0 %v867
        %888 = vmatprep.subr.bf16.mxu0 0
        %889 = vmatpush1.bf16.msra.mxu0 %v868
        %890 = vmatprep.subr.bf16.mxu0 0
        %891 = vmatpush1.bf16.msra.mxu0 %v869
        %892 = vmatprep.subr.bf16.mxu0 0
        %893 = vmatpush1.bf16.msra.mxu0 %v870
        %894 = vmatprep.subr.bf16.mxu0 0
        %895 = vmatpush1.bf16.msra.mxu0 %v871
        %896 = vmatprep.subr.bf16.mxu0 0
        %897 = vmatpush1.bf16.msra.mxu0 0
        %898 = vmatprep.subr.bf16.mxu0 0
        %899 = vmatpush1.bf16.msra.mxu0 0
        %900 = vmatprep.subr.bf16.mxu0 0
        %901 = vmatpush1.bf16.msra.mxu0 0
        %902 = vmatprep.subr.bf16.mxu0 0
        %903 = vmatpush1.bf16.msra.mxu0 0
        %904 = vmatprep.subr.bf16.mxu0 0
        %905 = vmatpush1.bf16.msra.mxu0 0
        %906 = vmatprep.subr.bf16.mxu0 0
        %907 = vmatpush1.bf16.msra.mxu0 0
        %908 = vmatprep.subr.bf16.mxu0 0
        %909 = vmatpush1.bf16.msra.mxu0 0
        %910 = vmatprep.subr.bf16.mxu0 0
        %911 = vmatpush1.bf16.msra.mxu0 0
        %912 = vmatprep.mubr.bf16.mxu0 0
        %913 = vmatmul.mubr.bf16.gmra.mrb[0].mxu0 %v468
        %v914 = vpop.f32.mrb[0].mxu0
        %v915 = vadd.f32 0.0, %v914
        %v916 = vpop.f32.mrb[0].mxu0
        %v917 = vpop.f32.mrb[0].mxu0
        %v918 = vpop.f32.mrb[0].mxu0
        %919 = vdwg.mxu0
        %v936 = vunpack.c.l.b16 %v400
        %v937 = vunpack.c.l.b16 %v401
        %v938 = vunpack.c.l.b16 %v402
        %v939 = vunpack.c.l.b16 %v403
        %v940 = vunpack.c.l.b16 %v404
        %v941 = vunpack.c.l.b16 %v405
        %v942 = vunpack.c.l.b16 %v406
        %v943 = vunpack.c.l.b16 %v407
        %v944 = vunpack.c.l.b16 %v408
        %v945 = vunpack.c.l.b16 %v409
        %v946 = vunpack.c.l.b16 %v410
        %v947 = vunpack.c.l.b16 %v411
        %v948 = vunpack.c.l.b16 %v412
        %v949 = vunpack.c.l.b16 %v413
        %v950 = vunpack.c.l.b16 %v414
        %v951 = vunpack.c.l.b16 %v415
        %v952 = vpack.c.b16 %v937, %v936
        %v953 = vpack.c.b16 %v939, %v938
        %v954 = vpack.c.b16 %v941, %v940
        %v955 = vpack.c.b16 %v943, %v942
        %v956 = vpack.c.b16 %v945, %v944
        %v957 = vpack.c.b16 %v947, %v946
        %v958 = vpack.c.b16 %v949, %v948
        %v959 = vpack.c.b16 %v951, %v950
        %968 = vmatprep.subr.bf16.mxu0 0
        %969 = vmatpush1.bf16.msra.mxu0 %v952
        %970 = vmatprep.subr.bf16.mxu0 0
        %971 = vmatpush1.bf16.msra.mxu0 %v953
        %972 = vmatprep.subr.bf16.mxu0 0
        %973 = vmatpush1.bf16.msra.mxu0 %v954
        %974 = vmatprep.subr.bf16.mxu0 0
        %975 = vmatpush1.bf16.msra.mxu0 %v955
        %976 = vmatprep.subr.bf16.mxu0 0
        %977 = vmatpush1.bf16.msra.mxu0 %v956
        %978 = vmatprep.subr.bf16.mxu0 0
        %979 = vmatpush1.bf16.msra.mxu0 %v957
        %980 = vmatprep.subr.bf16.mxu0 0
        %981 = vmatpush1.bf16.msra.mxu0 %v958
        %982 = vmatprep.subr.bf16.mxu0 0
        %983 = vmatpush1.bf16.msra.mxu0 %v959
        %984 = vmatprep.subr.bf16.mxu0 0
        %985 = vmatpush1.bf16.msra.mxu0 0
        %986 = vmatprep.subr.bf16.mxu0 0
        %987 = vmatpush1.bf16.msra.mxu0 0
        %988 = vmatprep.subr.bf16.mxu0 0
        %989 = vmatpush1.bf16.msra.mxu0 0
        %990 = vmatprep.subr.bf16.mxu0 0
        %991 = vmatpush1.bf16.msra.mxu0 0
        %992 = vmatprep.subr.bf16.mxu0 0
        %993 = vmatpush1.bf16.msra.mxu0 0
        %994 = vmatprep.subr.bf16.mxu0 0
        %995 = vmatpush1.bf16.msra.mxu0 0
        %996 = vmatprep.subr.bf16.mxu0 0
        %997 = vmatpush1.bf16.msra.mxu0 0
        %998 = vmatprep.subr.bf16.mxu0 0
        %999 = vmatpush1.bf16.msra.mxu0 0
        %1000 = vmatprep.mubr.bf16.mxu0 0
        %1001 = vmatmul.mubr.bf16.gmra.mrb[0].mxu0 %v469
        %v1002 = vpop.f32.mrb[0].mxu0
        %v1003 = vadd.f32 0.0, %v1002
        %v1004 = vpop.f32.mrb[0].mxu0
        %v1005 = vpop.f32.mrb[0].mxu0
        %v1006 = vpop.f32.mrb[0].mxu0
        %1007 = vdwg.mxu0
        %v1024 = vunpack.c.l.b16 %v416
        %v1025 = vunpack.c.l.b16 %v417
        %v1026 = vunpack.c.l.b16 %v418
        %v1027 = vunpack.c.l.b16 %v419
        %v1028 = vunpack.c.l.b16 %v420
        %v1029 = vunpack.c.l.b16 %v421
        %v1030 = vunpack.c.l.b16 %v422
        %v1031 = vunpack.c.l.b16 %v423
        %v1032 = vunpack.c.l.b16 %v424
        %v1033 = vunpack.c.l.b16 %v425
        %v1034 = vunpack.c.l.b16 %v426
        %v1035 = vunpack.c.l.b16 %v427
        %v1036 = vunpack.c.l.b16 %v428
        %v1037 = vunpack.c.l.b16 %v429
        %v1038 = vunpack.c.l.b16 %v430
        %v1039 = vunpack.c.l.b16 %v431
        %v1040 = vpack.c.b16 %v1025, %v1024
        %v1041 = vpack.c.b16 %v1027, %v1026
        %v1042 = vpack.c.b16 %v1029, %v1028
        %v1043 = vpack.c.b16 %v1031, %v1030
        %v1044 = vpack.c.b16 %v1033, %v1032
        %v1045 = vpack.c.b16 %v1035, %v1034
        %v1046 = vpack.c.b16 %v1037, %v1036
        %v1047 = vpack.c.b16 %v1039, %v1038
        %1056 = vmatprep.subr.bf16.mxu0 0
        %1057 = vmatpush1.bf16.msra.mxu0 %v1040
        %1058 = vmatprep.subr.bf16.mxu0 0
        %1059 = vmatpush1.bf16.msra.mxu0 %v1041
        %1060 = vmatprep.subr.bf16.mxu0 0
        %1061 = vmatpush1.bf16.msra.mxu0 %v1042
        %1062 = vmatprep.subr.bf16.mxu0 0
        %1063 = vmatpush1.bf16.msra.mxu0 %v1043
        %1064 = vmatprep.subr.bf16.mxu0 0
        %1065 = vmatpush1.bf16.msra.mxu0 %v1044
        %1066 = vmatprep.subr.bf16.mxu0 0
        %1067 = vmatpush1.bf16.msra.mxu0 %v1045
        %1068 = vmatprep.subr.bf16.mxu0 0
        %1069 = vmatpush1.bf16.msra.mxu0 %v1046
        %1070 = vmatprep.subr.bf16.mxu0 0
        %1071 = vmatpush1.bf16.msra.mxu0 %v1047
        %1072 = vmatprep.subr.bf16.mxu0 0
        %1073 = vmatpush1.bf16.msra.mxu0 0
        %1074 = vmatprep.subr.bf16.mxu0 0
        %1075 = vmatpush1.bf16.msra.mxu0 0
        %1076 = vmatprep.subr.bf16.mxu0 0
        %1077 = vmatpush1.bf16.msra.mxu0 0
        %1078 = vmatprep.subr.bf16.mxu0 0
        %1079 = vmatpush1.bf16.msra.mxu0 0
        %1080 = vmatprep.subr.bf16.mxu0 0
        %1081 = vmatpush1.bf16.msra.mxu0 0
        %1082 = vmatprep.subr.bf16.mxu0 0
        %1083 = vmatpush1.bf16.msra.mxu0 0
        %1084 = vmatprep.subr.bf16.mxu0 0
        %1085 = vmatpush1.bf16.msra.mxu0 0
        %1086 = vmatprep.subr.bf16.mxu0 0
        %1087 = vmatpush1.bf16.msra.mxu0 0
        %1088 = vmatprep.mubr.bf16.mxu0 0
        %1089 = vmatmul.mubr.bf16.gmra.mrb[0].mxu0 %v470
        %v1090 = vpop.f32.mrb[0].mxu0
        %v1091 = vadd.f32 0.0, %v1090
        %v1092 = vpop.f32.mrb[0].mxu0
        %v1093 = vpop.f32.mrb[0].mxu0
        %v1094 = vpop.f32.mrb[0].mxu0
        %1095 = vdwg.mxu0
        %v1112 = vunpack.c.l.b16 %v432
        %v1113 = vunpack.c.l.b16 %v433
        %v1114 = vunpack.c.l.b16 %v434
        %v1115 = vunpack.c.l.b16 %v435
        %v1116 = vunpack.c.l.b16 %v436
        %v1117 = vunpack.c.l.b16 %v437
        %v1118 = vunpack.c.l.b16 %v438
        %v1119 = vunpack.c.l.b16 %v439
        %v1120 = vunpack.c.l.b16 %v440
        %v1121 = vunpack.c.l.b16 %v441
        %v1122 = vunpack.c.l.b16 %v442
        %v1123 = vunpack.c.l.b16 %v443
        %v1124 = vunpack.c.l.b16 %v444
        %v1125 = vunpack.c.l.b16 %v445
        %v1126 = vunpack.c.l.b16 %v446
        %v1127 = vunpack.c.l.b16 %v447
        %v1128 = vpack.c.b16 %v1113, %v1112
        %v1129 = vpack.c.b16 %v1115, %v1114
        %v1130 = vpack.c.b16 %v1117, %v1116
        %v1131 = vpack.c.b16 %v1119, %v1118
        %v1132 = vpack.c.b16 %v1121, %v1120
        %v1133 = vpack.c.b16 %v1123, %v1122
        %v1134 = vpack.c.b16 %v1125, %v1124
        %v1135 = vpack.c.b16 %v1127, %v1126
        %1144 = vmatprep.subr.bf16.mxu0 0
        %1145 = vmatpush1.bf16.msra.mxu0 %v1128
        %1146 = vmatprep.subr.bf16.mxu0 0
        %1147 = vmatpush1.bf16.msra.mxu0 %v1129
        %1148 = vmatprep.subr.bf16.mxu0 0
        %1149 = vmatpush1.bf16.msra.mxu0 %v1130
        %1150 = vmatprep.subr.bf16.mxu0 0
        %1151 = vmatpush1.bf16.msra.mxu0 %v1131
        %1152 = vmatprep.subr.bf16.mxu0 0
        %1153 = vmatpush1.bf16.msra.mxu0 %v1132
        %1154 = vmatprep.subr.bf16.mxu0 0
        %1155 = vmatpush1.bf16.msra.mxu0 %v1133
        %1156 = vmatprep.subr.bf16.mxu0 0
        %1157 = vmatpush1.bf16.msra.mxu0 %v1134
        %1158 = vmatprep.subr.bf16.mxu0 0
        %1159 = vmatpush1.bf16.msra.mxu0 %v1135
        %1160 = vmatprep.subr.bf16.mxu0 0
        %1161 = vmatpush1.bf16.msra.mxu0 0
        %1162 = vmatprep.subr.bf16.mxu0 0
        %1163 = vmatpush1.bf16.msra.mxu0 0
        %1164 = vmatprep.subr.bf16.mxu0 0
        %1165 = vmatpush1.bf16.msra.mxu0 0
        %1166 = vmatprep.subr.bf16.mxu0 0
        %1167 = vmatpush1.bf16.msra.mxu0 0
        %1168 = vmatprep.subr.bf16.mxu0 0
        %1169 = vmatpush1.bf16.msra.mxu0 0
        %1170 = vmatprep.subr.bf16.mxu0 0
        %1171 = vmatpush1.bf16.msra.mxu0 0
        %1172 = vmatprep.subr.bf16.mxu0 0
        %1173 = vmatpush1.bf16.msra.mxu0 0
        %1174 = vmatprep.subr.bf16.mxu0 0
        %1175 = vmatpush1.bf16.msra.mxu0 0
        %1176 = vmatprep.mubr.bf16.mxu0 0
        %1177 = vmatmul.mubr.bf16.gmra.mrb[0].mxu0 %v471
        %v1178 = vpop.f32.mrb[0].mxu0
        %v1179 = vadd.f32 0.0, %v1178
        %v1180 = vpop.f32.mrb[0].mxu0
        %v1181 = vpop.f32.mrb[0].mxu0
        %v1182 = vpop.f32.mrb[0].mxu0
        %1183 = vdwg.mxu0
        %v1184 = vadd.f32 %v472, %v563
        %v1185 = vadd.f32 %v473, %v651
        %v1186 = vadd.f32 %v474, %v739
        %v1187 = vadd.f32 %v475, %v827
        %v1188 = vadd.f32 %v476, %v915
        %v1189 = vadd.f32 %v477, %v1003
        %v1190 = vadd.f32 %v478, %v1091
        %v1191 = vadd.f32 %v479, %v1179
        %1192 = vst [vmem:[#allocation2] sm:$0x1] %v1184
        %1193 = vst [vmem:[#allocation2 + $0x1] sm:$0x1] %v1185
        %1194 = vst [vmem:[#allocation2 + $0x2] sm:$0x1] %v1186
        %1195 = vst [vmem:[#allocation2 + $0x3] sm:$0x1] %v1187
        %1196 = vst [vmem:[#allocation2 + $0x4] sm:$0x1] %v1188
        %1197 = vst [vmem:[#allocation2 + $0x5] sm:$0x1] %v1189
        %1198 = vst [vmem:[#allocation2 + $0x6] sm:$0x1] %v1190
        %1199 = vst [vmem:[#allocation2 + $0x7] sm:$0x1] %v1191
        %v1200 = vld [vmem:[#allocation3] sm:$0xff]
        %v1201 = vunpack.c.l.bf16 %v464
        %v1202 = vunpack.c.l.bf16 %v465
        %v1203 = vunpack.c.l.bf16 %v466
        %v1204 = vunpack.c.l.bf16 %v467
        %v1205 = vunpack.c.l.bf16 %v468
        %v1206 = vunpack.c.l.bf16 %v469
        %v1207 = vunpack.c.l.bf16 %v470
        %v1208 = vunpack.c.l.bf16 %v471
        %vm1209 = vcmask 1040384
        %v1210 = vsel %vm1209, %v1201, 0.0
        %1211 = vadd.xlane.f32.xlu0 %v1210
        %v1212 = vpop.xlane.xlu0 %1211
        %v1213 = vsel %vm1209, %v1202, 0.0
        %1214 = vadd.xlane.f32.xlu0 %v1213
        %v1215 = vpop.xlane.xlu0 %1214
        %v1216 = vsel %vm1209, %v1203, 0.0
        %1217 = vadd.xlane.f32.xlu0 %v1216
        %v1218 = vpop.xlane.xlu0 %1217
        %v1219 = vsel %vm1209, %v1204, 0.0
        %1220 = vadd.xlane.f32.xlu0 %v1219
        %v1221 = vpop.xlane.xlu0 %1220
        %v1222 = vsel %vm1209, %v1205, 0.0
        %1223 = vadd.xlane.f32.xlu0 %v1222
        %v1224 = vpop.xlane.xlu0 %1223
        %v1225 = vsel %vm1209, %v1206, 0.0
        %1226 = vadd.xlane.f32.xlu0 %v1225
        %v1227 = vpop.xlane.xlu0 %1226
        %v1228 = vsel %vm1209, %v1207, 0.0
        %1229 = vadd.xlane.f32.xlu0 %v1228
        %v1230 = vpop.xlane.xlu0 %1229
        %v1231 = vsel %vm1209, %v1208, 0.0
        %1232 = vadd.xlane.f32.xlu0 %v1231
        %v1233 = vpop.xlane.xlu0 %1232
        %v1242 = vrot.slane %v1215, 7
        %vm1243 = vcmask 1041409
        %v1244 = vsel %vm1243, %v1242, %v1212
        %v1245 = vrot.slane %v1218, 6
        %vm1246 = vcmask 1042434
        %v1247 = vsel %vm1246, %v1245, %v1244
        %v1248 = vrot.slane %v1221, 5
        %vm1249 = vcmask 1043459
        %v1250 = vsel %vm1249, %v1248, %v1247
        %v1251 = vrot.slane %v1224, 4
        %vm1252 = vcmask 1044484
        %v1253 = vsel %vm1252, %v1251, %v1250
        %v1254 = vrot.slane %v1227, 3
        %vm1255 = vcmask 1045509
        %v1256 = vsel %vm1255, %v1254, %v1253
        %v1257 = vrot.slane %v1230, 2
        %vm1258 = vcmask 1046534
        %v1259 = vsel %vm1258, %v1257, %v1256
        %v1260 = vrot.slane %v1233, 1
        %vm1261 = vcmask 1047559
        %v1262 = vsel %vm1261, %v1260, %v1259
        %v1264 = vadd.f32 %v1200, %v1262
        %vm1265 = vcmask 7168
        %1266 = vst.msk [vmem:[#allocation3] sm:$0xff] %vm1265, %v1264
        %p1267 = scmp.eq.s32.totalorder %s30, 1
        // Predicated region
        $region49: #{tpu_custom_call.1} parent=35 // pred_check
          %p1268 = pneg %p1267
        $region50: #{tpu_custom_call.1} parent=35 // pred_check_branch
          %1270 = sbr.rel (%p1268) target = $region52
        $region51: #{tpu_custom_call.1} parent=35 // pred_region
          %v1271 = vld [vmem:[#allocation3] sm:$0xff]
          %v1272 = vmax.f32 %v1271, 1e-09
          %v1273 = vld [vmem:[#allocation2] sm:$0x1]
          %v1274 = vld [vmem:[#allocation2 + $0x1] sm:$0x1]
          %v1275 = vld [vmem:[#allocation2 + $0x2] sm:$0x1]
          %v1276 = vld [vmem:[#allocation2 + $0x3] sm:$0x1]
          %v1277 = vld [vmem:[#allocation2 + $0x4] sm:$0x1]
          %v1278 = vld [vmem:[#allocation2 + $0x5] sm:$0x1]
          %v1279 = vld [vmem:[#allocation2 + $0x6] sm:$0x1]
          %v1280 = vld [vmem:[#allocation2 + $0x7] sm:$0x1]
          %v1281 = vrcp.pop %v1272
          %1283 = vset.pattern.permute.xlu0 0
          %1284 = vperm.xlu0 %1283, %v1281
          %v1285 = vpop.permute.xlu0 %1284
          %v1286 = vlaneseq
          %v1287 = vshrl.u32 %v1286, 7
          %v1288 = vsub.s32 0, %v1287
          %v1289 = vrot.slane %v1285, %v1288
          %v1290 = vlaneseq
          %v1291 = vshrl.u32 %v1290, 7
          %v1292 = vsub.s32 1, %v1291
          %v1293 = vrot.slane %v1285, %v1292
          %v1294 = vlaneseq
          %v1295 = vshrl.u32 %v1294, 7
          %v1296 = vsub.s32 2, %v1295
          %v1297 = vrot.slane %v1285, %v1296
          %v1298 = vlaneseq
          %v1299 = vshrl.u32 %v1298, 7
          %v1300 = vsub.s32 3, %v1299
          %v1301 = vrot.slane %v1285, %v1300
          %v1302 = vlaneseq
          %v1303 = vshrl.u32 %v1302, 7
          %v1304 = vsub.s32 4, %v1303
          %v1305 = vrot.slane %v1285, %v1304
          %v1306 = vlaneseq
          %v1307 = vshrl.u32 %v1306, 7
          %v1308 = vsub.s32 5, %v1307
          %v1309 = vrot.slane %v1285, %v1308
          %v1310 = vlaneseq
          %v1311 = vshrl.u32 %v1310, 7
          %v1312 = vsub.s32 6, %v1311
          %v1313 = vrot.slane %v1285, %v1312
          %v1314 = vlaneseq
          %v1315 = vshrl.u32 %v1314, 7
          %v1316 = vsub.s32 7, %v1315
          %v1317 = vrot.slane %v1285, %v1316
          %v1326 = vmul.f32 %v1273, %v1289
          %v1327 = vmul.f32 %v1274, %v1293
          %v1328 = vmul.f32 %v1275, %v1297
          %v1329 = vmul.f32 %v1276, %v1301
          %v1330 = vmul.f32 %v1277, %v1305
          %v1331 = vmul.f32 %v1278, %v1309
          %v1332 = vmul.f32 %v1279, %v1313
          %v1333 = vmul.f32 %v1280, %v1317
          %v1334 = vld [vmem:[%s2] sm:$0x1]
          %s1335 = sld [smem:[#allocation4]]
          %v1336 = vstv %s1335
          %v1345 = vcombine.low %v1326, %v1327
          %v1346 = vcombine.low %v1328, %v1329
          %v1347 = vcombine.low %v1330, %v1331
          %v1348 = vcombine.low %v1332, %v1333
          %v1350 = vunpack.c.l.s4 1966171168
          %v1351 = vunpack.c.0.s8 %v1350
          %v1352 = vlaneseq
          %v1353 = vshrl.u32 %v1352, 7
          %v1354 = vsub.s32 %v1351, %v1353
          %v1355 = vrot.slane %v1345, %v1354
          %v1357 = vunpack.c.l.s4 1966171168
          %v1358 = vunpack.c.0.s8 %v1357
          %v1359 = vlaneseq
          %v1360 = vshrl.u32 %v1359, 7
          %v1361 = vsub.s32 %v1358, %v1360
          %v1362 = vrot.slane %v1346, %v1361
          %v1364 = vunpack.c.l.s4 1966171168
          %v1365 = vunpack.c.0.s8 %v1364
          %v1366 = vlaneseq
          %v1367 = vshrl.u32 %v1366, 7
          %v1368 = vsub.s32 %v1365, %v1367
          %v1369 = vrot.slane %v1347, %v1368
          %v1371 = vunpack.c.l.s4 1966171168
          %v1372 = vunpack.c.0.s8 %v1371
          %v1373 = vlaneseq
          %v1374 = vshrl.u32 %v1373, 7
          %v1375 = vsub.s32 %v1372, %v1374
          %v1376 = vrot.slane %v1348, %v1375
          %v1377 = vcombine.low %v1355, %v1362
          %v1378 = vcombine.low %v1369, %v1376
          %v1380 = vunpack.c.l.s4 1966171168
          %v1381 = vunpack.c.0.s8 %v1380
          %v1382 = vlaneseq
          %v1383 = vshrl.u32 %v1382, 7
          %v1384 = vsub.s32 %v1381, %v1383
          %v1385 = vrot.slane %v1377, %v1384
          %v1387 = vunpack.c.l.s4 1966171168
          %v1388 = vunpack.c.0.s8 %v1387
          %v1389 = vlaneseq
          %v1390 = vshrl.u32 %v1389, 7
          %v1391 = vsub.s32 %v1388, %v1390
          %v1392 = vrot.slane %v1378, %v1391
          %v1393 = vcombine.low %v1385, %v1392
          %1395 = vmatprep.subr.mxu0 0.0
          %1396 = vmatpush1.xpose.msra.mxu0 %v1393
          %1397 = vmatprep.subr.mxu0 0.0
          %1398 = vmatpush1.xpose.msra.mxu0 0.0
          %1399 = vmatprep.subr.mxu0 0.0
          %1400 = vmatpush1.xpose.msra.mxu0 0.0
          %1401 = vmatprep.subr.mxu0 0.0
          %1402 = vmatpush1.xpose.msra.mxu0 0.0
          %1403 = vmatprep.subr.mxu0 0.0
          %1404 = vmatpush1.xpose.msra.mxu0 0.0
          %1405 = vmatprep.subr.mxu0 0.0
          %1406 = vmatpush1.xpose.msra.mxu0 0.0
          %1407 = vmatprep.subr.mxu0 0.0
          %1408 = vmatpush1.xpose.msra.mxu0 0.0
          %1409 = vmatprep.subr.mxu0 0.0
          %1410 = vmatpush1.xpose.msra.mxu0 0.0
          %1411 = vmatprep.subr.mxu0 0.0
          %1412 = vmatpush1.xpose.msra.mxu0 0.0
          %1413 = vmatprep.subr.mxu0 0.0
          %1414 = vmatpush1.xpose.msra.mxu0 0.0
          %1415 = vmatprep.subr.mxu0 0.0
          %1416 = vmatpush1.xpose.msra.mxu0 0.0
          %1417 = vmatprep.subr.mxu0 0.0
          %1418 = vmatpush1.xpose.msra.mxu0 0.0
          %1419 = vmatprep.subr.mxu0 0.0
          %1420 = vmatpush1.xpose.msra.mxu0 0.0
          %1421 = vmatprep.subr.mxu0 0.0
          %1422 = vmatpush1.xpose.msra.mxu0 0.0
          %1423 = vmatprep.subr.mxu0 0.0
          %1424 = vmatpush1.xpose.msra.mxu0 0.0
          %1425 = vmatprep.subr.mxu0 0.0
          %1426 = vmatpush1.xpose.msra.mxu0 0.0
          %1427 = vmatprep.subr.mxu0 0.0
          %1428 = vmatpush1.xpose.msra.mxu0 0.0
          %1429 = vmatprep.subr.mxu0 0.0
          %1430 = vmatpush1.xpose.msra.mxu0 0.0
          %1431 = vmatprep.subr.mxu0 0.0
          %1432 = vmatpush1.xpose.msra.mxu0 0.0
          %1433 = vmatprep.subr.mxu0 0.0
          %1434 = vmatpush1.xpose.msra.mxu0 0.0
          %1435 = vmatprep.subr.mxu0 0.0
          %1436 = vmatpush1.xpose.msra.mxu0 0.0
          %1437 = vmatprep.subr.mxu0 0.0
          %1438 = vmatpush1.xpose.msra.mxu0 0.0
          %1439 = vmatprep.subr.mxu0 0.0
          %1440 = vmatpush1.xpose.msra.mxu0 0.0
          %1441 = vmatprep.subr.mxu0 0.0
          %1442 = vmatpush1.xpose.msra.mxu0 0.0
          %1443 = vmatprep.subr.mxu0 0.0
          %1444 = vmatpush1.xpose.msra.mxu0 0.0
          %1445 = vmatprep.subr.mxu0 0.0
          %1446 = vmatpush1.xpose.msra.mxu0 0.0
          %1447 = vmatprep.subr.mxu0 0.0
          %1448 = vmatpush1.xpose.msra.mxu0 0.0
          %1449 = vmatprep.subr.mxu0 0.0
          %1450 = vmatpush1.xpose.msra.mxu0 0.0
          %1451 = vmatprep.subr.mxu0 0.0
          %1452 = vmatpush1.xpose.msra.mxu0 0.0
          %1453 = vmatprep.subr.mxu0 0.0
          %1454 = vmatpush1.xpose.msra.mxu0 0.0
          %1455 = vmatprep.subr.mxu0 0.0
          %1456 = vmatpush1.xpose.msra.mxu0 0.0
          %1457 = vmatprep.subr.mxu0 0.0
          %1458 = vmatpush1.xpose.msra.mxu0 0.0
          %1459 = vmatprep.mubr.f32.mxu0 0.0
          %1460 = vmatmul.mubr.f32.gmra.mrb[0].mxu0 %v1334
          %v1461 = vpop.f32.mrb[0].mxu0
          %v1462 = vadd.f32 %v1336, %v1461
          %v1463 = vpop.f32.mrb[0].mxu0
          %1464 = vdwg.mxu0
          %vm1465 = vcmask 57344
          %1466 = vst.msk [vmem:[%s301] sm:$0x1] %vm1465, %v1462
        $region52: #{tpu_custom_call.1} parent=35 // pred_fallthru
          _
        %s1467 = sand.u32 %s143, 1
        %s1468 = scalar_lea.sflag [#allocation7], %s1467
        %s1469 = sand.u32 %s143, 1
        %s1470 = scalar_lea.vmem [#allocation10], %s1469
        // Predicated region
        $region53: #{tpu_custom_call.1} parent=35 // pred_check
          %p1471 = pneg %p153
        $region54: #{tpu_custom_call.1} parent=35 // pred_check_branch
          %1473 = sbr.rel (%p1471) target = $region56
        $region55: #{tpu_custom_call.1} parent=35 // pred_region
          %s1475 = ssub.s32 16, 16
          %1476 = vsyncadd %s1468, %s1475
          %s1477 = smul.addr %s29, 16
          %s1478 = scalar_lea.hbm %s4, %s1477
          %s1480 = sshll.u32 %s1470, 4
          %s1481 = int_to_ptr.vmem [resolvable:$true] %s1480
          %1483 = dma.vmem_to_hbm [thread:$0]  %s1481, 16, %s1478, %s1468
        $region56: #{tpu_custom_call.1} parent=35 // pred_fallthru
          _
      $region36: #{tpu_custom_call.1} parent=5 // pred_fallthru
        _
      %p1484 = scmp.le.s32.totalorder 2, %s20
      // Predicated region
      $region57: #{tpu_custom_call.1} parent=5 // pred_check
        %p1485 = pneg %p1484
      $region58: #{tpu_custom_call.1} parent=5 // pred_check_branch
        %1487 = sbr.rel (%p1485) target = $region60
      $region59: #{tpu_custom_call.1} parent=5 // pred_region
        %s1488 = ssub.s32 %s20, 2
        // Predicated region
        $region61: #{tpu_custom_call.1} parent=59 // pred_check
          %p1489 = pneg %p159
        $region62: #{tpu_custom_call.1} parent=59 // pred_check_branch
          %1491 = sbr.rel (%p1489) target = $region64
        $region63: #{tpu_custom_call.1} parent=59 // pred_region
          %s1492 = sand.u32 %s144, 1
          %s1493 = scalar_lea.sflag [#allocation7], %s1492
          %s1494 = sand.u32 %s144, 1
          %s1495 = scalar_lea.vmem [#allocation10], %s1494
          %1496 = dma.done %s1493, 16
        $region64: #{tpu_custom_call.1} parent=59 // pred_fallthru
          _
      $region60: #{tpu_custom_call.1} parent=5 // pred_fallthru
        _
    $region6: #{tpu_custom_call.1} parent=1 // loop_footer
      %s24 = sadd.s32 1, %s20
    $region7: #{tpu_custom_call.1} parent=1 // loop_footer_branch
      %19 = sbr.rel target = $region3
    $region8: #{tpu_custom_call.1} parent=1 // loop_exit
      _
    %1497 = vsyncpa [#allocation6], 1
    %s1498 = scalar_lea.sflag [#allocation6], 1
    %1499 = vsyncpa %s1498, 1
    %1500 = vsyncpa [#allocation9], 1
    %s1501 = scalar_lea.sflag [#allocation9], 1
    %1502 = vsyncpa %s1501, 1
    %1503 = vsyncpa [#allocation7], 1
    %s1504 = scalar_lea.sflag [#allocation7], 1
    %1505 = vsyncpa %s1504, 1

</llo_original>
